<compile_context>
chip_gen: v7x
topology: tpu7x:2x2x1
jax: 0.10.0
libtpu: 0.0.40
codegen_flags: <defaults>
</compile_context>

<pallas_src>
import functools

import jax
import jax.numpy as jnp
from jax.experimental import pallas as pl
from jax.experimental.pallas import tpu as pltpu


# ---------------------------------------------------------------------------
# Shared in-kernel math
# ---------------------------------------------------------------------------
def _dot_f32(a, w):
    # Cast the activation to the (possibly bf16) weight dtype only at the MXU
    # operand; accumulate in f32.
    return jnp.dot(a.astype(w.dtype), w, preferred_element_type=jnp.float32)


def _lstm_gates(lin, c0, dw, hp):
    """Gate elementwise math, always in f32.  hp is the (padded) hidden size,
    a multiple of 128, so every slice is lane-aligned."""
    i_t = jax.nn.sigmoid(lin[:, :hp])
    f_t = jax.nn.sigmoid(lin[:, hp:2 * hp])
    g_t = jnp.tanh(lin[:, 2 * hp:3 * hp])
    o_t = jax.nn.sigmoid(lin[:, 3 * hp:])
    c_t = f_t * c0 + i_t * g_t + dw
    h_t = o_t * jnp.tanh(c_t)
    return h_t, c_t


# ---------------------------------------------------------------------------
# Kernel 1: per-layer sequential grid (large problems)
# ---------------------------------------------------------------------------
def _sclstm_layer_kernel(x_ref, d_ref, h0_ref, c0_ref, wx_ref, wh0_ref,
                         whp_ref, b_ref, wd_ref,
                         h_out_ref, c_out_ref, flat_ref, h_prev_ref,
                         *, hidden_size):
    """One grid step == one stacked layer; h_{l-1} carried in VMEM scratch."""
    layer = pl.program_id(0)

    # Layer 0 has no previous-layer state.  Its whp tile (mapped to layer 1's
    # weights by the index_map) is multiplied by this zero carry -> exactly 0.
    @pl.when(layer == 0)
    def _():
        h_prev_ref[...] = jnp.zeros_like(h_prev_ref)

    lin = (_dot_f32(x_ref[...], wx_ref[0])
           + _dot_f32(h0_ref[0], wh0_ref[0])
           + _dot_f32(h_prev_ref[...], whp_ref[0])
           + b_ref[0])
    dw = jnp.tanh(_dot_f32(d_ref[...], wd_ref[0]))
    h_t, c_t = _lstm_gates(lin, c0_ref[0], dw, hidden_size)

    h_out_ref[0] = h_t
    c_out_ref[0] = c_t
    flat_ref[...] = h_t          # lane-dense column block `layer` of flat_h
    h_prev_ref[...] = h_t        # carry; dropout(p=0.0) is identity


# ---------------------------------------------------------------------------
# Kernel 2: all layers in one grid step (small problems; unrolled layer loop)
# ---------------------------------------------------------------------------
def _sclstm_fused_kernel(x_ref, d_ref, h0_ref, c0_ref, wx_ref, wh0_ref,
                         whp_ref, b_ref, wd_ref,
                         h_out_ref, c_out_ref, flat_ref,
                         *, num_layers, hidden_size):
    hp = hidden_size
    x = x_ref[...]
    d = d_ref[...]
    h_prev = None
    for i in range(num_layers):           # small static L -> unrolled
        lin = (_dot_f32(x, wx_ref[i])
               + _dot_f32(h0_ref[i], wh0_ref[i])
               + b_ref[i])
        if i > 0:                          # layer 0: skip the h_prev dot
            lin = lin + _dot_f32(h_prev, whp_ref[i - 1])
        dw = jnp.tanh(_dot_f32(d, wd_ref[i]))
        h_t, c_t = _lstm_gates(lin, c0_ref[i], dw, hp)
        h_out_ref[i] = h_t
        c_out_ref[i] = c_t
        flat_ref[:, i * hp:(i + 1) * hp] = h_t   # lane-aligned static slice
        h_prev = h_t                       # dropout(p=0.0) is identity


# ---------------------------------------------------------------------------
# Host-side packing / helpers
# ---------------------------------------------------------------------------
def _round_up(v, m):
    return (v + m - 1) // m * m


def init_params(key, num_layers, input_size, hidden_size, kwd_vocab_sz):
    """Deterministic per-layer params with the PyTorch module's shapes."""
    params = []
    nxt_size = input_size
    for _ in range(num_layers):
        k1, k2, k3, key = jax.random.split(key, 4)
        params.append({
            "weight": 0.1 * jax.random.normal(
                k1, (nxt_size + hidden_size, 4 * hidden_size), jnp.float32),
            "bias": 0.1 * jax.random.normal(
                k2, (4 * hidden_size,), jnp.float32),
            "wd": 0.1 * jax.random.normal(
                k3, (kwd_vocab_sz, hidden_size), jnp.float32),
        })
        nxt_size = hidden_size + input_size
    return params


def _pack_params(params, input_size, hidden_size, hid_p, weight_dtype):
    """Split each layer's weight into W_x / W_hprev / W_h0 (no zero block for
    layer 0) and pad gate columns / hidden rows to hid_p (multiple of 128).
    Padded rows/columns are zero, so padded gate lanes stay exactly zero."""
    hs, In = hidden_size, input_size

    def pad_gate_cols(m):                   # [r, 4*hs] -> [r, 4*hid_p]
        m = m.reshape(m.shape[0], 4, hs)
        m = jnp.pad(m, ((0, 0), (0, 0), (0, hid_p - hs)))
        return m.reshape(m.shape[0], 4 * hid_p)

    def pad_rows(m):                        # [hs, c] -> [hid_p, c]
        return jnp.pad(m, ((0, hid_p - hs), (0, 0)))

    wx_l, wh0_l, whp_l, b_l, wd_l = [], [], [], [], []
    for i, p in enumerate(params):
        w = jnp.asarray(p["weight"], jnp.float32)
        wx = w[:In]                                   # rows for x
        if i == 0:
            wh0 = w[In:]                              # rows for h_0[0]
        else:
            whp = w[In:In + hs]                       # rows for h_{l-1}
            wh0 = w[In + hs:]                         # rows for h_0[l]
            whp_l.append(pad_rows(pad_gate_cols(whp)).astype(weight_dtype))
        wx_l.append(pad_gate_cols(wx).astype(weight_dtype))
        wh0_l.append(pad_rows(pad_gate_cols(wh0)).astype(weight_dtype))
        b = jnp.asarray(p["bias"], jnp.float32).reshape(4, hs)
        b = jnp.pad(b, ((0, 0), (0, hid_p - hs))).reshape(1, 4 * hid_p)
        b_l.append(b)                                 # bias stays f32
        wd = jnp.asarray(p["wd"], jnp.float32)
        wd_l.append(jnp.pad(wd, ((0, 0), (0, hid_p - hs))).astype(weight_dtype))
    if not whp_l:                                     # num_layers == 1
        whp_l.append(jnp.zeros((hid_p, 4 * hid_p), weight_dtype))
    return (jnp.stack(wx_l), jnp.stack(wh0_l), jnp.stack(whp_l),
            jnp.stack(b_l), jnp.stack(wd_l))


def _vmem_budget_bytes():
    try:
        cap = pltpu.get_tpu_info().vmem_capacity_bytes
    except Exception:
        cap = 64 * 1024 * 1024          # assume the smallest (v7x per-TC VMEM)
    return cap * 3 // 4                 # headroom for compiler internal scratch


# ---------------------------------------------------------------------------
# Public forward
# ---------------------------------------------------------------------------
def sclstm_multicell(x, h_c, d, params, *, input_size, hidden_size,
                     weight_dtype=jnp.bfloat16, force_layer_grid=False):
    """Pallas forward.  Returns (flat_h, (h_stack, c_stack)) like PyTorch.

    weight_dtype=bf16 (default) halves the dominant HBM weight traffic; gate
    math / carried state stay f32.  Use jnp.float32 for bit-faithful results.
    """
    h0_all, c0_all = h_c[0], h_c[1]
    num_layers, bs, hs = h0_all.shape
    kwd = d.shape[-1]
    assert hs == hidden_size and x.shape[-1] == input_size

    hid_p = _round_up(hs, 128)          # lane-align gate slices / flat blocks
    bs_p = _round_up(bs, 8)             # sublane-align the batch

    wx, wh0, whp, b, wd = _pack_params(params, input_size, hs, hid_p,
                                       weight_dtype)

    def pad2(a, rows, cols):
        return jnp.pad(jnp.asarray(a, jnp.float32),
                       ((0, rows - a.shape[0]), (0, cols - a.shape[1])))

    x_p = pad2(x, bs_p, input_size)
    d_p = pad2(d, bs_p, kwd)
    h0_p = jnp.pad(jnp.asarray(h0_all, jnp.float32),
                   ((0, 0), (0, bs_p - bs), (0, hid_p - hs)))
    c0_p = jnp.pad(jnp.asarray(c0_all, jnp.float32),
                   ((0, 0), (0, bs_p - bs), (0, hid_p - hs)))

    wbytes = jnp.dtype(weight_dtype).itemsize
    weight_bytes = ((wx.size + wh0.size + whp.size + wd.size) * wbytes
                    + b.size * 4)
    act_bytes = (x_p.size + d_p.size + h0_p.size + c0_p.size) * 4
    out_bytes = 3 * num_layers * bs_p * hid_p * 4
    budget = _vmem_budget_bytes()

    out_shape = (
        jax.ShapeDtypeStruct((num_layers, bs_p, hid_p), jnp.float32),
        jax.ShapeDtypeStruct((num_layers, bs_p, hid_p), jnp.float32),
        jax.ShapeDtypeStruct((bs_p, num_layers * hid_p), jnp.float32),
    )

    # Small problems: everything (double-buffered) fits comfortably -> one
    # grid step with an unrolled in-kernel layer loop (removes the per-step
    # grid overhead, which is ~half the runtime when a layer's weight DMA is
    # only a few hundred nanoseconds).
    est_fused = weight_bytes + act_bytes + out_bytes
    use_fused = (not force_layer_grid) and (2 * est_fused + (8 << 20)
                                            <= budget // 2)

    if use_fused:
        vmem_limit = int(min(budget, max(32 << 20, 3 * est_fused + (8 << 20))))
        kernel = functools.partial(_sclstm_fused_kernel,
                                   num_layers=num_layers, hidden_size=hid_p)
        n_hp = whp.shape[0]
        grid_spec = pltpu.PrefetchScalarGridSpec(
            num_scalar_prefetch=0,
            grid=(1,),
            in_specs=[
                pl.BlockSpec((bs_p, input_size), lambda i: (0, 0)),
                pl.BlockSpec((bs_p, kwd), lambda i: (0, 0)),
                pl.BlockSpec((num_layers, bs_p, hid_p), lambda i: (0, 0, 0)),
                pl.BlockSpec((num_layers, bs_p, hid_p), lambda i: (0, 0, 0)),
                pl.BlockSpec((num_layers, input_size, 4 * hid_p),
                             lambda i: (0, 0, 0)),
                pl.BlockSpec((num_layers, hid_p, 4 * hid_p),
                             lambda i: (0, 0, 0)),
                pl.BlockSpec((n_hp, hid_p, 4 * hid_p), lambda i: (0, 0, 0)),
                pl.BlockSpec((num_layers, 1, 4 * hid_p), lambda i: (0, 0, 0)),
                pl.BlockSpec((num_layers, kwd, hid_p), lambda i: (0, 0, 0)),
            ],
            out_specs=(
                pl.BlockSpec((num_layers, bs_p, hid_p), lambda i: (0, 0, 0)),
                pl.BlockSpec((num_layers, bs_p, hid_p), lambda i: (0, 0, 0)),
                pl.BlockSpec((bs_p, num_layers * hid_p), lambda i: (0, 0)),
            ),
        )
    else:
        w_tile = ((input_size + 2 * hid_p) * 4 * hid_p + kwd * hid_p) * wbytes \
                 + 4 * hid_p * 4
        io_tile = (bs_p * (input_size + kwd) + 2 * bs_p * hid_p) * 4 \
                  + 4 * bs_p * hid_p * 4
        est_grid = 2 * (w_tile + io_tile)
        vmem_limit = int(min(budget, max(32 << 20, 2 * est_grid + (8 << 20))))
        kernel = functools.partial(_sclstm_layer_kernel, hidden_size=hid_p)
        grid_spec = pltpu.PrefetchScalarGridSpec(
            num_scalar_prefetch=0,
            grid=(num_layers,),
            in_specs=[
                pl.BlockSpec((bs_p, input_size), lambda l: (0, 0)),
                pl.BlockSpec((bs_p, kwd), lambda l: (0, 0)),
                pl.BlockSpec((1, bs_p, hid_p), lambda l: (l, 0, 0)),
                pl.BlockSpec((1, bs_p, hid_p), lambda l: (l, 0, 0)),
                pl.BlockSpec((1, input_size, 4 * hid_p), lambda l: (l, 0, 0)),
                pl.BlockSpec((1, hid_p, 4 * hid_p), lambda l: (l, 0, 0)),
                # Layer 0 maps onto layer 1's W_hprev tile (its contribution
                # is 0 against the zeroed carry), so the zero block is never
                # streamed and step 1's tile is already resident.
                pl.BlockSpec((1, hid_p, 4 * hid_p),
                             lambda l: (jnp.maximum(l - 1, 0), 0, 0)),
                pl.BlockSpec((1, 1, 4 * hid_p), lambda l: (l, 0, 0)),
                pl.BlockSpec((1, kwd, hid_p), lambda l: (l, 0, 0)),
            ],
            out_specs=(
                pl.BlockSpec((1, bs_p, hid_p), lambda l: (l, 0, 0)),
                pl.BlockSpec((1, bs_p, hid_p), lambda l: (l, 0, 0)),
                pl.BlockSpec((bs_p, hid_p), lambda l: (0, l)),
            ),
            scratch_shapes=[pltpu.VMEM((bs_p, hid_p), jnp.float32)],
        )

    outs = pl.pallas_call(
        kernel,
        out_shape=out_shape,
        grid_spec=grid_spec,
        compiler_params=pltpu.CompilerParams(
            # layer axis is sequential (h_prev carry) -> "arbitrary".
            dimension_semantics=("arbitrary",),
            vmem_limit_bytes=vmem_limit,
        ),
    )(x_p, d_p, h0_p, c0_p, wx, wh0, whp, b, wd)

    h_out_p, c_out_p, flat_p = outs
    h_out = h_out_p[:, :bs, :hs]
    c_out = c_out_p[:, :bs, :hs]
    if hid_p == hs:
        flat_h = flat_p if bs_p == bs else flat_p[:bs]   # lane-dense, no reshape
    else:
        # padded hidden: rebuild flat_h from the trimmed per-layer stack.
        flat_h = jnp.transpose(h_out, (1, 0, 2)).reshape(bs, num_layers * hs)
    return flat_h, (h_out, c_out)


# ---------------------------------------------------------------------------
# Pure-JAX reference mirroring the PyTorch forward (dropout p=0)
# ---------------------------------------------------------------------------
def sclstm_multicell_ref(x, h_c, d, params, *, input_size, hidden_size):
    h0, c0 = h_c[0], h_c[1]
    hs = hidden_size
    h_list, c_list = [], []
    h_prev = None
    for i, p in enumerate(params):
        x_in = x if i == 0 else jnp.concatenate([x, h_prev], axis=-1)
        x_h = jnp.concatenate([x_in, h0[i]], axis=-1)
        lin = x_h @ p["weight"] + p["bias"]
        i_t = jax.nn.sigmoid(lin[:, :hs])
        f_t = jax.nn.sigmoid(lin[:, hs:2 * hs])
        g_t = jnp.tanh(lin[:, 2 * hs:3 * hs])
        o_t = jax.nn.sigmoid(lin[:, 3 * hs:])
        c_t = f_t * c0[i] + i_t * g_t + jnp.tanh(d @ p["wd"])
        h_t = o_t * jnp.tanh(c_t)
        h_list.append(h_t)
        c_list.append(c_t)
        h_prev = h_t
    return (jnp.concatenate(h_list, axis=-1),
            (jnp.stack(h_list), jnp.stack(c_list)))


if __name__ == "__main__":
    def check(name, got, want, atol, rtol):
        flat_h, (h_s, c_s) = got
        flat_r, (h_r, c_r) = want
        assert flat_h.shape == flat_r.shape, name
        assert h_s.shape == h_r.shape, name
        assert c_s.shape == c_r.shape, name
        assert jnp.allclose(flat_h, flat_r, atol=atol, rtol=rtol), name
        assert jnp.allclose(h_s, h_r, atol=atol, rtol=rtol), name
        assert jnp.allclose(c_s, c_r, atol=atol, rtol=rtol), name

    # --- primary, lane-aligned config ---
    num_layers, batch, input_size, hidden_size, kwd_sz = 3, 8, 16, 128, 8
    key = jax.random.PRNGKey(0)
    kx, kd, kh, kp = jax.random.split(key, 4)
    x = jax.random.normal(kx, (batch, input_size), jnp.float32)
    d = jax.random.normal(kd, (batch, kwd_sz), jnp.float32)
    h_c = 0.1 * jax.random.normal(
        kh, (2, num_layers, batch, hidden_size), jnp.float32)
    params = init_params(kp, num_layers, input_size, hidden_size, kwd_sz)
    want = sclstm_multicell_ref(x, h_c, d, params, input_size=input_size,
                                hidden_size=hidden_size)

    # f32 weights, fused single-grid-step path (bit-faithful).
    got = sclstm_multicell(x, h_c, d, params, input_size=input_size,
                           hidden_size=hidden_size, weight_dtype=jnp.float32)
    jax.block_until_ready(got)
    check("f32/fused", got, want, 1e-4, 1e-4)

    # f32 weights, per-layer sequential-grid path.
    got = sclstm_multicell(x, h_c, d, params, input_size=input_size,
                           hidden_size=hidden_size, weight_dtype=jnp.float32,
                           force_layer_grid=True)
    jax.block_until_ready(got)
    check("f32/grid", got, want, 1e-4, 1e-4)

    # bf16 weight streaming (default): half HBM weight traffic; f32 gate math.
    got = sclstm_multicell(x, h_c, d, params, input_size=input_size,
                           hidden_size=hidden_size)
    jax.block_until_ready(got)
    check("bf16/fused", got, want, 5e-2, 5e-2)

    got = sclstm_multicell(x, h_c, d, params, input_size=input_size,
                           hidden_size=hidden_size, force_layer_grid=True)
    jax.block_until_ready(got)
    check("bf16/grid", got, want, 5e-2, 5e-2)

    # --- misaligned config: exercises the host-side (8,128) padding path ---
    nl2, b2, in2, hs2, kwd2 = 2, 5, 10, 72, 6
    k2 = jax.random.PRNGKey(1)
    kx, kd, kh, kp = jax.random.split(k2, 4)
    x2 = jax.random.normal(kx, (b2, in2), jnp.float32)
    d2 = jax.random.normal(kd, (b2, kwd2), jnp.float32)
    h_c2 = 0.1 * jax.random.normal(kh, (2, nl2, b2, hs2), jnp.float32)
    params2 = init_params(kp, nl2, in2, hs2, kwd2)
    want2 = sclstm_multicell_ref(x2, h_c2, d2, params2, input_size=in2,
                                 hidden_size=hs2)

    got2 = sclstm_multicell(x2, h_c2, d2, params2, input_size=in2,
                            hidden_size=hs2, weight_dtype=jnp.float32)
    jax.block_until_ready(got2)
    check("f32/fused/padded", got2, want2, 1e-4, 1e-4)

    got2 = sclstm_multicell(x2, h_c2, d2, params2, input_size=in2,
                            hidden_size=hs2, weight_dtype=jnp.float32,
                            force_layer_grid=True)
    jax.block_until_ready(got2)
    check("f32/grid/padded", got2, want2, 1e-4, 1e-4)

    print("KERNEL_OK")
</pallas_src>

<mosaic_0001>
module attributes {stable_mosaic.version = 11 : i64} {
  func.func @_sclstm_fused_kernel(%arg0: i32, %arg1: memref<8x16xf32, #tpu.memory_space<vmem>>, %arg2: memref<8x8xf32, #tpu.memory_space<vmem>>, %arg3: memref<3x8x128xf32, #tpu.memory_space<vmem>>, %arg4: memref<3x8x128xf32, #tpu.memory_space<vmem>>, %arg5: memref<3x16x512xf32, #tpu.memory_space<vmem>>, %arg6: memref<3x128x512xf32, #tpu.memory_space<vmem>>, %arg7: memref<2x128x512xf32, #tpu.memory_space<vmem>>, %arg8: memref<3x1x512xf32, #tpu.memory_space<vmem>>, %arg9: memref<3x8x128xf32, #tpu.memory_space<vmem>>, %arg10: memref<3x8x128xf32, #tpu.memory_space<vmem>>, %arg11: memref<3x8x128xf32, #tpu.memory_space<vmem>>, %arg12: memref<8x384xf32, #tpu.memory_space<vmem>>) attributes {dimension_semantics = [#tpu.dimension_semantics<arbitrary>], iteration_bounds = array<i64: 1>, scalar_prefetch = 0 : i64, scratch_operands = 0 : i64, tpu.core_type = #tpu.core_type<tc>, window_params = [{pipeline_mode = #tpu.pipeline_mode<synchronous>, transform_indices = @transform_0, window_bounds = array<i64: 8, 16>}, {pipeline_mode = #tpu.pipeline_mode<synchronous>, transform_indices = @transform_1, window_bounds = array<i64: 8, 8>}, {pipeline_mode = #tpu.pipeline_mode<synchronous>, transform_indices = @transform_2, window_bounds = array<i64: 3, 8, 128>}, {pipeline_mode = #tpu.pipeline_mode<synchronous>, transform_indices = @transform_3, window_bounds = array<i64: 3, 8, 128>}, {pipeline_mode = #tpu.pipeline_mode<synchronous>, transform_indices = @transform_4, window_bounds = array<i64: 3, 16, 512>}, {pipeline_mode = #tpu.pipeline_mode<synchronous>, transform_indices = @transform_5, window_bounds = array<i64: 3, 128, 512>}, {pipeline_mode = #tpu.pipeline_mode<synchronous>, transform_indices = @transform_6, window_bounds = array<i64: 2, 128, 512>}, {pipeline_mode = #tpu.pipeline_mode<synchronous>, transform_indices = @transform_7, window_bounds = array<i64: 3, 1, 512>}, {pipeline_mode = #tpu.pipeline_mode<synchronous>, transform_indices = @transform_8, window_bounds = array<i64: 3, 8, 128>}, {pipeline_mode = #tpu.pipeline_mode<synchronous>, transform_indices = @transform_9, window_bounds = array<i64: 3, 8, 128>}, {pipeline_mode = #tpu.pipeline_mode<synchronous>, transform_indices = @transform_10, window_bounds = array<i64: 3, 8, 128>}, {pipeline_mode = #tpu.pipeline_mode<synchronous>, transform_indices = @transform_11, window_bounds = array<i64: 8, 384>}]} {
    %c0 = arith.constant 0 : index
    %c0_0 = arith.constant 0 : index
    %0 = vector.load %arg1[%c0, %c0_0] : memref<8x16xf32, #tpu.memory_space<vmem>>, vector<8x16xf32>
    %c0_1 = arith.constant 0 : index
    %c0_2 = arith.constant 0 : index
    %1 = vector.load %arg2[%c0_1, %c0_2] : memref<8x8xf32, #tpu.memory_space<vmem>>, vector<8x8xf32>
    %c0_3 = arith.constant 0 : index
    %c0_4 = arith.constant 0 : index
    %c0_5 = arith.constant 0 : index
    %2 = vector.load %arg5[%c0_3, %c0_4, %c0_5] : memref<3x16x512xf32, #tpu.memory_space<vmem>>, vector<1x16x512xf32>
    %3 = vector.shape_cast %2 : vector<1x16x512xf32> to vector<16x512xf32>
    %cst = arith.constant dense<0.000000e+00> : vector<8x512xf32>
    %4 = tpu.matmul %0, %3, %cst {dimension_numbers = #tpu.dot_dimension_numbers<[1], [0], [0], [1], [0, 0, 1, 1], [], []>} : vector<8x16xf32>, vector<16x512xf32>, vector<8x512xf32> -> vector<8x512xf32>
    %c0_6 = arith.constant 0 : index
    %c0_7 = arith.constant 0 : index
    %c0_8 = arith.constant 0 : index
    %5 = vector.load %arg3[%c0_6, %c0_7, %c0_8] : memref<3x8x128xf32, #tpu.memory_space<vmem>>, vector<1x8x128xf32>
    %6 = vector.shape_cast %5 : vector<1x8x128xf32> to vector<8x128xf32>
    %c0_9 = arith.constant 0 : index
    %c0_10 = arith.constant 0 : index
    %c0_11 = arith.constant 0 : index
    %7 = vector.load %arg6[%c0_9, %c0_10, %c0_11] : memref<3x128x512xf32, #tpu.memory_space<vmem>>, vector<1x128x512xf32>
    %8 = vector.shape_cast %7 : vector<1x128x512xf32> to vector<128x512xf32>
    %cst_12 = arith.constant dense<0.000000e+00> : vector<8x512xf32>
    %9 = tpu.matmul %6, %8, %cst_12 {dimension_numbers = #tpu.dot_dimension_numbers<[1], [0], [0], [1], [0, 0, 1, 1], [], []>} : vector<8x128xf32>, vector<128x512xf32>, vector<8x512xf32> -> vector<8x512xf32>
    %10 = arith.addf %4, %9 : vector<8x512xf32>
    %c0_13 = arith.constant 0 : index
    %c0_14 = arith.constant 0 : index
    %c0_15 = arith.constant 0 : index
    %11 = vector.load %arg8[%c0_13, %c0_14, %c0_15] : memref<3x1x512xf32, #tpu.memory_space<vmem>>, vector<1x1x512xf32>
    %12 = vector.shape_cast %11 : vector<1x1x512xf32> to vector<1x512xf32>
    %13 = vector.broadcast %12 : vector<1x512xf32> to vector<8x512xf32>
    %14 = arith.addf %10, %13 : vector<8x512xf32>
    %c0_16 = arith.constant 0 : index
    %c0_17 = arith.constant 0 : index
    %c0_18 = arith.constant 0 : index
    %15 = vector.load %arg9[%c0_16, %c0_17, %c0_18] : memref<3x8x128xf32, #tpu.memory_space<vmem>>, vector<1x8x128xf32>
    %16 = vector.shape_cast %15 : vector<1x8x128xf32> to vector<8x128xf32>
    %cst_19 = arith.constant dense<0.000000e+00> : vector<8x128xf32>
    %17 = tpu.matmul %1, %16, %cst_19 {dimension_numbers = #tpu.dot_dimension_numbers<[1], [0], [0], [1], [0, 0, 1, 1], [], []>} : vector<8x8xf32>, vector<8x128xf32>, vector<8x128xf32> -> vector<8x128xf32>
    %18 = math.tanh %17 : vector<8x128xf32>
    %c0_20 = arith.constant 0 : index
    %c0_21 = arith.constant 0 : index
    %c0_22 = arith.constant 0 : index
    %19 = vector.load %arg4[%c0_20, %c0_21, %c0_22] : memref<3x8x128xf32, #tpu.memory_space<vmem>>, vector<1x8x128xf32>
    %20 = vector.shape_cast %19 : vector<1x8x128xf32> to vector<8x128xf32>
    %21 = vector.extract_strided_slice %14 {offsets = [0, 0], sizes = [8, 128], strides = [1, 1]} : vector<8x512xf32> to vector<8x128xf32>
    %22 = arith.negf %21 : vector<8x128xf32>
    %23 = math.exp %22 : vector<8x128xf32>
    %cst_23 = arith.constant 1.000000e+00 : f32
    %24 = vector.broadcast %cst_23 : f32 to vector<8x128xf32>
    %25 = arith.addf %24, %23 : vector<8x128xf32>
    %26 = arith.divf %24, %25 : vector<8x128xf32>
    %27 = vector.extract_strided_slice %14 {offsets = [0, 128], sizes = [8, 128], strides = [1, 1]} : vector<8x512xf32> to vector<8x128xf32>
    %28 = arith.negf %27 : vector<8x128xf32>
    %29 = math.exp %28 : vector<8x128xf32>
    %cst_24 = arith.constant 1.000000e+00 : f32
    %30 = vector.broadcast %cst_24 : f32 to vector<8x128xf32>
    %31 = arith.addf %30, %29 : vector<8x128xf32>
    %32 = arith.divf %30, %31 : vector<8x128xf32>
    %33 = vector.extract_strided_slice %14 {offsets = [0, 256], sizes = [8, 128], strides = [1, 1]} : vector<8x512xf32> to vector<8x128xf32>
    %34 = math.tanh %33 : vector<8x128xf32>
    %35 = vector.extract_strided_slice %14 {offsets = [0, 384], sizes = [8, 128], strides = [1, 1]} : vector<8x512xf32> to vector<8x128xf32>
    %36 = arith.negf %35 : vector<8x128xf32>
    %37 = math.exp %36 : vector<8x128xf32>
    %cst_25 = arith.constant 1.000000e+00 : f32
    %38 = vector.broadcast %cst_25 : f32 to vector<8x128xf32>
    %39 = arith.addf %38, %37 : vector<8x128xf32>
    %40 = arith.divf %38, %39 : vector<8x128xf32>
    %41 = arith.mulf %32, %20 : vector<8x128xf32>
    %42 = arith.mulf %26, %34 : vector<8x128xf32>
    %43 = arith.addf %41, %42 : vector<8x128xf32>
    %44 = arith.addf %43, %18 : vector<8x128xf32>
    %45 = math.tanh %44 : vector<8x128xf32>
    %46 = arith.mulf %40, %45 : vector<8x128xf32>
    %c0_26 = arith.constant 0 : index
    %c0_27 = arith.constant 0 : index
    %c0_28 = arith.constant 0 : index
    %47 = vector.load %arg10[%c0_26, %c0_27, %c0_28] : memref<3x8x128xf32, #tpu.memory_space<vmem>>, vector<1x8x128xf32>
    %48 = vector.shape_cast %47 : vector<1x8x128xf32> to vector<8x128xf32>
    %49 = vector.shape_cast %46 : vector<8x128xf32> to vector<1x8x128xf32>
    tpu.vector_store %arg10[%c0_26, %c0_27, %c0_28], %49 {strides = array<i32>} : memref<3x8x128xf32, #tpu.memory_space<vmem>>, vector<1x8x128xf32>,
    %c0_29 = arith.constant 0 : index
    %c0_30 = arith.constant 0 : index
    %c0_31 = arith.constant 0 : index
    %50 = vector.load %arg11[%c0_29, %c0_30, %c0_31] : memref<3x8x128xf32, #tpu.memory_space<vmem>>, vector<1x8x128xf32>
    %51 = vector.shape_cast %50 : vector<1x8x128xf32> to vector<8x128xf32>
    %52 = vector.shape_cast %44 : vector<8x128xf32> to vector<1x8x128xf32>
    tpu.vector_store %arg11[%c0_29, %c0_30, %c0_31], %52 {strides = array<i32>} : memref<3x8x128xf32, #tpu.memory_space<vmem>>, vector<1x8x128xf32>,
    %c0_32 = arith.constant 0 : index
    %c0_33 = arith.constant 0 : index
    %53 = vector.load %arg12[%c0_32, %c0_33] : memref<8x384xf32, #tpu.memory_space<vmem>>, vector<8x128xf32>
    tpu.vector_store %arg12[%c0_32, %c0_33], %46 {strides = array<i32>} : memref<8x384xf32, #tpu.memory_space<vmem>>, vector<8x128xf32>,
    %c1 = arith.constant 1 : index
    %c0_34 = arith.constant 0 : index
    %c0_35 = arith.constant 0 : index
    %54 = vector.load %arg5[%c1, %c0_34, %c0_35] : memref<3x16x512xf32, #tpu.memory_space<vmem>>, vector<1x16x512xf32>
    %55 = vector.shape_cast %54 : vector<1x16x512xf32> to vector<16x512xf32>
    %cst_36 = arith.constant dense<0.000000e+00> : vector<8x512xf32>
    %56 = tpu.matmul %0, %55, %cst_36 {dimension_numbers = #tpu.dot_dimension_numbers<[1], [0], [0], [1], [0, 0, 1, 1], [], []>} : vector<8x16xf32>, vector<16x512xf32>, vector<8x512xf32> -> vector<8x512xf32>
    %c1_37 = arith.constant 1 : index
    %c0_38 = arith.constant 0 : index
    %c0_39 = arith.constant 0 : index
    %57 = vector.load %arg3[%c1_37, %c0_38, %c0_39] : memref<3x8x128xf32, #tpu.memory_space<vmem>>, vector<1x8x128xf32>
    %58 = vector.shape_cast %57 : vector<1x8x128xf32> to vector<8x128xf32>
    %c1_40 = arith.constant 1 : index
    %c0_41 = arith.constant 0 : index
    %c0_42 = arith.constant 0 : index
    %59 = vector.load %arg6[%c1_40, %c0_41, %c0_42] : memref<3x128x512xf32, #tpu.memory_space<vmem>>, vector<1x128x512xf32>
    %60 = vector.shape_cast %59 : vector<1x128x512xf32> to vector<128x512xf32>
    %cst_43 = arith.constant dense<0.000000e+00> : vector<8x512xf32>
    %61 = tpu.matmul %58, %60, %cst_43 {dimension_numbers = #tpu.dot_dimension_numbers<[1], [0], [0], [1], [0, 0, 1, 1], [], []>} : vector<8x128xf32>, vector<128x512xf32>, vector<8x512xf32> -> vector<8x512xf32>
    %62 = arith.addf %56, %61 : vector<8x512xf32>
    %c1_44 = arith.constant 1 : index
    %c0_45 = arith.constant 0 : index
    %c0_46 = arith.constant 0 : index
    %63 = vector.load %arg8[%c1_44, %c0_45, %c0_46] : memref<3x1x512xf32, #tpu.memory_space<vmem>>, vector<1x1x512xf32>
    %64 = vector.shape_cast %63 : vector<1x1x512xf32> to vector<1x512xf32>
    %65 = vector.broadcast %64 : vector<1x512xf32> to vector<8x512xf32>
    %66 = arith.addf %62, %65 : vector<8x512xf32>
    %c0_47 = arith.constant 0 : index
    %c0_48 = arith.constant 0 : index
    %c0_49 = arith.constant 0 : index
    %67 = vector.load %arg7[%c0_47, %c0_48, %c0_49] : memref<2x128x512xf32, #tpu.memory_space<vmem>>, vector<1x128x512xf32>
    %68 = vector.shape_cast %67 : vector<1x128x512xf32> to vector<128x512xf32>
    %cst_50 = arith.constant dense<0.000000e+00> : vector<8x512xf32>
    %69 = tpu.matmul %46, %68, %cst_50 {dimension_numbers = #tpu.dot_dimension_numbers<[1], [0], [0], [1], [0, 0, 1, 1], [], []>} : vector<8x128xf32>, vector<128x512xf32>, vector<8x512xf32> -> vector<8x512xf32>
    %70 = arith.addf %66, %69 : vector<8x512xf32>
    %c1_51 = arith.constant 1 : index
    %c0_52 = arith.constant 0 : index
    %c0_53 = arith.constant 0 : index
    %71 = vector.load %arg9[%c1_51, %c0_52, %c0_53] : memref<3x8x128xf32, #tpu.memory_space<vmem>>, vector<1x8x128xf32>
    %72 = vector.shape_cast %71 : vector<1x8x128xf32> to vector<8x128xf32>
    %cst_54 = arith.constant dense<0.000000e+00> : vector<8x128xf32>
    %73 = tpu.matmul %1, %72, %cst_54 {dimension_numbers = #tpu.dot_dimension_numbers<[1], [0], [0], [1], [0, 0, 1, 1], [], []>} : vector<8x8xf32>, vector<8x128xf32>, vector<8x128xf32> -> vector<8x128xf32>
    %74 = math.tanh %73 : vector<8x128xf32>
    %c1_55 = arith.constant 1 : index
    %c0_56 = arith.constant 0 : index
    %c0_57 = arith.constant 0 : index
    %75 = vector.load %arg4[%c1_55, %c0_56, %c0_57] : memref<3x8x128xf32, #tpu.memory_space<vmem>>, vector<1x8x128xf32>
    %76 = vector.shape_cast %75 : vector<1x8x128xf32> to vector<8x128xf32>
    %77 = vector.extract_strided_slice %70 {offsets = [0, 0], sizes = [8, 128], strides = [1, 1]} : vector<8x512xf32> to vector<8x128xf32>
    %78 = arith.negf %77 : vector<8x128xf32>
    %79 = math.exp %78 : vector<8x128xf32>
    %cst_58 = arith.constant 1.000000e+00 : f32
    %80 = vector.broadcast %cst_58 : f32 to vector<8x128xf32>
    %81 = arith.addf %80, %79 : vector<8x128xf32>
    %82 = arith.divf %80, %81 : vector<8x128xf32>
    %83 = vector.extract_strided_slice %70 {offsets = [0, 128], sizes = [8, 128], strides = [1, 1]} : vector<8x512xf32> to vector<8x128xf32>
    %84 = arith.negf %83 : vector<8x128xf32>
    %85 = math.exp %84 : vector<8x128xf32>
    %cst_59 = arith.constant 1.000000e+00 : f32
    %86 = vector.broadcast %cst_59 : f32 to vector<8x128xf32>
    %87 = arith.addf %86, %85 : vector<8x128xf32>
    %88 = arith.divf %86, %87 : vector<8x128xf32>
    %89 = vector.extract_strided_slice %70 {offsets = [0, 256], sizes = [8, 128], strides = [1, 1]} : vector<8x512xf32> to vector<8x128xf32>
    %90 = math.tanh %89 : vector<8x128xf32>
    %91 = vector.extract_strided_slice %70 {offsets = [0, 384], sizes = [8, 128], strides = [1, 1]} : vector<8x512xf32> to vector<8x128xf32>
    %92 = arith.negf %91 : vector<8x128xf32>
    %93 = math.exp %92 : vector<8x128xf32>
    %cst_60 = arith.constant 1.000000e+00 : f32
    %94 = vector.broadcast %cst_60 : f32 to vector<8x128xf32>
    %95 = arith.addf %94, %93 : vector<8x128xf32>
    %96 = arith.divf %94, %95 : vector<8x128xf32>
    %97 = arith.mulf %88, %76 : vector<8x128xf32>
    %98 = arith.mulf %82, %90 : vector<8x128xf32>
    %99 = arith.addf %97, %98 : vector<8x128xf32>
    %100 = arith.addf %99, %74 : vector<8x128xf32>
    %101 = math.tanh %100 : vector<8x128xf32>
    %102 = arith.mulf %96, %101 : vector<8x128xf32>
    %c1_61 = arith.constant 1 : index
    %c0_62 = arith.constant 0 : index
    %c0_63 = arith.constant 0 : index
    %103 = vector.load %arg10[%c1_61, %c0_62, %c0_63] : memref<3x8x128xf32, #tpu.memory_space<vmem>>, vector<1x8x128xf32>
    %104 = vector.shape_cast %103 : vector<1x8x128xf32> to vector<8x128xf32>
    %105 = vector.shape_cast %102 : vector<8x128xf32> to vector<1x8x128xf32>
    tpu.vector_store %arg10[%c1_61, %c0_62, %c0_63], %105 {strides = array<i32>} : memref<3x8x128xf32, #tpu.memory_space<vmem>>, vector<1x8x128xf32>,
    %c1_64 = arith.constant 1 : index
    %c0_65 = arith.constant 0 : index
    %c0_66 = arith.constant 0 : index
    %106 = vector.load %arg11[%c1_64, %c0_65, %c0_66] : memref<3x8x128xf32, #tpu.memory_space<vmem>>, vector<1x8x128xf32>
    %107 = vector.shape_cast %106 : vector<1x8x128xf32> to vector<8x128xf32>
    %108 = vector.shape_cast %100 : vector<8x128xf32> to vector<1x8x128xf32>
    tpu.vector_store %arg11[%c1_64, %c0_65, %c0_66], %108 {strides = array<i32>} : memref<3x8x128xf32, #tpu.memory_space<vmem>>, vector<1x8x128xf32>,
    %c0_67 = arith.constant 0 : index
    %c128 = arith.constant 128 : index
    %109 = vector.load %arg12[%c0_67, %c128] : memref<8x384xf32, #tpu.memory_space<vmem>>, vector<8x128xf32>
    tpu.vector_store %arg12[%c0_67, %c128], %102 {strides = array<i32>} : memref<8x384xf32, #tpu.memory_space<vmem>>, vector<8x128xf32>,
    %c2 = arith.constant 2 : index
    %c0_68 = arith.constant 0 : index
    %c0_69 = arith.constant 0 : index
    %110 = vector.load %arg5[%c2, %c0_68, %c0_69] : memref<3x16x512xf32, #tpu.memory_space<vmem>>, vector<1x16x512xf32>
    %111 = vector.shape_cast %110 : vector<1x16x512xf32> to vector<16x512xf32>
    %cst_70 = arith.constant dense<0.000000e+00> : vector<8x512xf32>
    %112 = tpu.matmul %0, %111, %cst_70 {dimension_numbers = #tpu.dot_dimension_numbers<[1], [0], [0], [1], [0, 0, 1, 1], [], []>} : vector<8x16xf32>, vector<16x512xf32>, vector<8x512xf32> -> vector<8x512xf32>
    %c2_71 = arith.constant 2 : index
    %c0_72 = arith.constant 0 : index
    %c0_73 = arith.constant 0 : index
    %113 = vector.load %arg3[%c2_71, %c0_72, %c0_73] : memref<3x8x128xf32, #tpu.memory_space<vmem>>, vector<1x8x128xf32>
    %114 = vector.shape_cast %113 : vector<1x8x128xf32> to vector<8x128xf32>
    %c2_74 = arith.constant 2 : index
    %c0_75 = arith.constant 0 : index
    %c0_76 = arith.constant 0 : index
    %115 = vector.load %arg6[%c2_74, %c0_75, %c0_76] : memref<3x128x512xf32, #tpu.memory_space<vmem>>, vector<1x128x512xf32>
    %116 = vector.shape_cast %115 : vector<1x128x512xf32> to vector<128x512xf32>
    %cst_77 = arith.constant dense<0.000000e+00> : vector<8x512xf32>
    %117 = tpu.matmul %114, %116, %cst_77 {dimension_numbers = #tpu.dot_dimension_numbers<[1], [0], [0], [1], [0, 0, 1, 1], [], []>} : vector<8x128xf32>, vector<128x512xf32>, vector<8x512xf32> -> vector<8x512xf32>
    %118 = arith.addf %112, %117 : vector<8x512xf32>
    %c2_78 = arith.constant 2 : index
    %c0_79 = arith.constant 0 : index
    %c0_80 = arith.constant 0 : index
    %119 = vector.load %arg8[%c2_78, %c0_79, %c0_80] : memref<3x1x512xf32, #tpu.memory_space<vmem>>, vector<1x1x512xf32>
    %120 = vector.shape_cast %119 : vector<1x1x512xf32> to vector<1x512xf32>
    %121 = vector.broadcast %120 : vector<1x512xf32> to vector<8x512xf32>
    %122 = arith.addf %118, %121 : vector<8x512xf32>
    %c1_81 = arith.constant 1 : index
    %c0_82 = arith.constant 0 : index
    %c0_83 = arith.constant 0 : index
    %123 = vector.load %arg7[%c1_81, %c0_82, %c0_83] : memref<2x128x512xf32, #tpu.memory_space<vmem>>, vector<1x128x512xf32>
    %124 = vector.shape_cast %123 : vector<1x128x512xf32> to vector<128x512xf32>
    %cst_84 = arith.constant dense<0.000000e+00> : vector<8x512xf32>
    %125 = tpu.matmul %102, %124, %cst_84 {dimension_numbers = #tpu.dot_dimension_numbers<[1], [0], [0], [1], [0, 0, 1, 1], [], []>} : vector<8x128xf32>, vector<128x512xf32>, vector<8x512xf32> -> vector<8x512xf32>
    %126 = arith.addf %122, %125 : vector<8x512xf32>
    %c2_85 = arith.constant 2 : index
    %c0_86 = arith.constant 0 : index
    %c0_87 = arith.constant 0 : index
    %127 = vector.load %arg9[%c2_85, %c0_86, %c0_87] : memref<3x8x128xf32, #tpu.memory_space<vmem>>, vector<1x8x128xf32>
    %128 = vector.shape_cast %127 : vector<1x8x128xf32> to vector<8x128xf32>
    %cst_88 = arith.constant dense<0.000000e+00> : vector<8x128xf32>
    %129 = tpu.matmul %1, %128, %cst_88 {dimension_numbers = #tpu.dot_dimension_numbers<[1], [0], [0], [1], [0, 0, 1, 1], [], []>} : vector<8x8xf32>, vector<8x128xf32>, vector<8x128xf32> -> vector<8x128xf32>
    %130 = math.tanh %129 : vector<8x128xf32>
    %c2_89 = arith.constant 2 : index
    %c0_90 = arith.constant 0 : index
    %c0_91 = arith.constant 0 : index
    %131 = vector.load %arg4[%c2_89, %c0_90, %c0_91] : memref<3x8x128xf32, #tpu.memory_space<vmem>>, vector<1x8x128xf32>
    %132 = vector.shape_cast %131 : vector<1x8x128xf32> to vector<8x128xf32>
    %133 = vector.extract_strided_slice %126 {offsets = [0, 0], sizes = [8, 128], strides = [1, 1]} : vector<8x512xf32> to vector<8x128xf32>
    %134 = arith.negf %133 : vector<8x128xf32>
    %135 = math.exp %134 : vector<8x128xf32>
    %cst_92 = arith.constant 1.000000e+00 : f32
    %136 = vector.broadcast %cst_92 : f32 to vector<8x128xf32>
    %137 = arith.addf %136, %135 : vector<8x128xf32>
    %138 = arith.divf %136, %137 : vector<8x128xf32>
    %139 = vector.extract_strided_slice %126 {offsets = [0, 128], sizes = [8, 128], strides = [1, 1]} : vector<8x512xf32> to vector<8x128xf32>
    %140 = arith.negf %139 : vector<8x128xf32>
    %141 = math.exp %140 : vector<8x128xf32>
    %cst_93 = arith.constant 1.000000e+00 : f32
    %142 = vector.broadcast %cst_93 : f32 to vector<8x128xf32>
    %143 = arith.addf %142, %141 : vector<8x128xf32>
    %144 = arith.divf %142, %143 : vector<8x128xf32>
    %145 = vector.extract_strided_slice %126 {offsets = [0, 256], sizes = [8, 128], strides = [1, 1]} : vector<8x512xf32> to vector<8x128xf32>
    %146 = math.tanh %145 : vector<8x128xf32>
    %147 = vector.extract_strided_slice %126 {offsets = [0, 384], sizes = [8, 128], strides = [1, 1]} : vector<8x512xf32> to vector<8x128xf32>
    %148 = arith.negf %147 : vector<8x128xf32>
    %149 = math.exp %148 : vector<8x128xf32>
    %cst_94 = arith.constant 1.000000e+00 : f32
    %150 = vector.broadcast %cst_94 : f32 to vector<8x128xf32>
    %151 = arith.addf %150, %149 : vector<8x128xf32>
    %152 = arith.divf %150, %151 : vector<8x128xf32>
    %153 = arith.mulf %144, %132 : vector<8x128xf32>
    %154 = arith.mulf %138, %146 : vector<8x128xf32>
    %155 = arith.addf %153, %154 : vector<8x128xf32>
    %156 = arith.addf %155, %130 : vector<8x128xf32>
    %157 = math.tanh %156 : vector<8x128xf32>
    %158 = arith.mulf %152, %157 : vector<8x128xf32>
    %c2_95 = arith.constant 2 : index
    %c0_96 = arith.constant 0 : index
    %c0_97 = arith.constant 0 : index
    %159 = vector.load %arg10[%c2_95, %c0_96, %c0_97] : memref<3x8x128xf32, #tpu.memory_space<vmem>>, vector<1x8x128xf32>
    %160 = vector.shape_cast %159 : vector<1x8x128xf32> to vector<8x128xf32>
    %161 = vector.shape_cast %158 : vector<8x128xf32> to vector<1x8x128xf32>
    tpu.vector_store %arg10[%c2_95, %c0_96, %c0_97], %161 {strides = array<i32>} : memref<3x8x128xf32, #tpu.memory_space<vmem>>, vector<1x8x128xf32>,
    %c2_98 = arith.constant 2 : index
    %c0_99 = arith.constant 0 : index
    %c0_100 = arith.constant 0 : index
    %162 = vector.load %arg11[%c2_98, %c0_99, %c0_100] : memref<3x8x128xf32, #tpu.memory_space<vmem>>, vector<1x8x128xf32>
    %163 = vector.shape_cast %162 : vector<1x8x128xf32> to vector<8x128xf32>
    %164 = vector.shape_cast %156 : vector<8x128xf32> to vector<1x8x128xf32>
    tpu.vector_store %arg11[%c2_98, %c0_99, %c0_100], %164 {strides = array<i32>} : memref<3x8x128xf32, #tpu.memory_space<vmem>>, vector<1x8x128xf32>,
    %c0_101 = arith.constant 0 : index
    %c256 = arith.constant 256 : index
    %165 = vector.load %arg12[%c0_101, %c256] : memref<8x384xf32, #tpu.memory_space<vmem>>, vector<8x128xf32>
    tpu.vector_store %arg12[%c0_101, %c256], %158 {strides = array<i32>} : memref<8x384xf32, #tpu.memory_space<vmem>>, vector<8x128xf32>,
    return
  }
  func.func @transform_0(%arg0: i32) -> (i32, i32) {
    %c0_i32 = arith.constant 0 : i32
    %c0_i32_0 = arith.constant 0 : i32
    %c0_i32_1 = arith.constant 0 : i32
    return %c0_i32, %c0_i32_0 : i32, i32
  }
  func.func @transform_1(%arg0: i32) -> (i32, i32) {
    %c0_i32 = arith.constant 0 : i32
    %c0_i32_0 = arith.constant 0 : i32
    %c0_i32_1 = arith.constant 0 : i32
    return %c0_i32, %c0_i32_0 : i32, i32
  }
  func.func @transform_2(%arg0: i32) -> (i32, i32, i32) {
    %c0_i32 = arith.constant 0 : i32
    %c0_i32_0 = arith.constant 0 : i32
    %c0_i32_1 = arith.constant 0 : i32
    %c0_i32_2 = arith.constant 0 : i32
    return %c0_i32, %c0_i32_0, %c0_i32_1 : i32, i32, i32
  }
  func.func @transform_3(%arg0: i32) -> (i32, i32, i32) {
    %c0_i32 = arith.constant 0 : i32
    %c0_i32_0 = arith.constant 0 : i32
    %c0_i32_1 = arith.constant 0 : i32
    %c0_i32_2 = arith.constant 0 : i32
    return %c0_i32, %c0_i32_0, %c0_i32_1 : i32, i32, i32
  }
  func.func @transform_4(%arg0: i32) -> (i32, i32, i32) {
    %c0_i32 = arith.constant 0 : i32
    %c0_i32_0 = arith.constant 0 : i32
    %c0_i32_1 = arith.constant 0 : i32
    %c0_i32_2 = arith.constant 0 : i32
    return %c0_i32, %c0_i32_0, %c0_i32_1 : i32, i32, i32
  }
  func.func @transform_5(%arg0: i32) -> (i32, i32, i32) {
    %c0_i32 = arith.constant 0 : i32
    %c0_i32_0 = arith.constant 0 : i32
    %c0_i32_1 = arith.constant 0 : i32
    %c0_i32_2 = arith.constant 0 : i32
    return %c0_i32, %c0_i32_0, %c0_i32_1 : i32, i32, i32
  }
  func.func @transform_6(%arg0: i32) -> (i32, i32, i32) {
    %c0_i32 = arith.constant 0 : i32
    %c0_i32_0 = arith.constant 0 : i32
    %c0_i32_1 = arith.constant 0 : i32
    %c0_i32_2 = arith.constant 0 : i32
    return %c0_i32, %c0_i32_0, %c0_i32_1 : i32, i32, i32
  }
  func.func @transform_7(%arg0: i32) -> (i32, i32, i32) {
    %c0_i32 = arith.constant 0 : i32
    %c0_i32_0 = arith.constant 0 : i32
    %c0_i32_1 = arith.constant 0 : i32
    %c0_i32_2 = arith.constant 0 : i32
    return %c0_i32, %c0_i32_0, %c0_i32_1 : i32, i32, i32
  }
  func.func @transform_8(%arg0: i32) -> (i32, i32, i32) {
    %c0_i32 = arith.constant 0 : i32
    %c0_i32_0 = arith.constant 0 : i32
    %c0_i32_1 = arith.constant 0 : i32
    %c0_i32_2 = arith.constant 0 : i32
    return %c0_i32, %c0_i32_0, %c0_i32_1 : i32, i32, i32
  }
  func.func @transform_9(%arg0: i32) -> (i32, i32, i32) {
    %c0_i32 = arith.constant 0 : i32
    %c0_i32_0 = arith.constant 0 : i32
    %c0_i32_1 = arith.constant 0 : i32
    %c0_i32_2 = arith.constant 0 : i32
    return %c0_i32, %c0_i32_0, %c0_i32_1 : i32, i32, i32
  }
  func.func @transform_10(%arg0: i32) -> (i32, i32, i32) {
    %c0_i32 = arith.constant 0 : i32
    %c0_i32_0 = arith.constant 0 : i32
    %c0_i32_1 = arith.constant 0 : i32
    %c0_i32_2 = arith.constant 0 : i32
    return %c0_i32, %c0_i32_0, %c0_i32_1 : i32, i32, i32
  }
  func.func @transform_11(%arg0: i32) -> (i32, i32) {
    %c0_i32 = arith.constant 0 : i32
    %c0_i32_0 = arith.constant 0 : i32
    %c0_i32_1 = arith.constant 0 : i32
    return %c0_i32, %c0_i32_0 : i32, i32
  }
}

</mosaic_0001>

<llo_original>
// kernel: tpu_custom_call.1
$region0: #{tpu_custom_call.1}
  #allocation0 [shape = 'u32[]', space=smem, size = 0x4, offset = 0x4, fixed_abs, tag = 'smem constant byte address 0x4 - core index']
  #allocation1 [shape = 'u32[144,128]{1,0:T(1,128)}', space=vmem, size = 0x12000, scoped, tag = 'internal scratch']
  %s0 = inlined_call_operand.hbm [shape: f32[8,16], index: 0, kind: input, shape index: {}]
  %s1 = inlined_call_operand.hbm [shape: f32[8,8], index: 1, kind: input, shape index: {}]
  %s2 = inlined_call_operand.hbm [shape: f32[3,8,128], index: 2, kind: input, shape index: {}]
  %s3 = inlined_call_operand.hbm [shape: f32[3,8,128], index: 3, kind: input, shape index: {}]
  %s4 = inlined_call_operand.hbm [shape: f32[3,16,512], index: 4, kind: input, shape index: {}]
  %s5 = inlined_call_operand.hbm [shape: f32[3,128,512], index: 5, kind: input, shape index: {}]
  %s6 = inlined_call_operand.hbm [shape: f32[2,128,512], index: 6, kind: input, shape index: {}]
  %s7 = inlined_call_operand.hbm [shape: f32[3,1,512], index: 7, kind: input, shape index: {}]
  %s8 = inlined_call_operand.vmem [shape: f32[3,8,128], index: 8, kind: input, shape index: {}]
  %s9 = inlined_call_operand.hbm [shape: f32[3,8,128], index: 9, kind: output, shape index: {0}]
  %s10 = inlined_call_operand.hbm [shape: f32[3,8,128], index: 10, kind: output, shape index: {1}]
  %s11 = inlined_call_operand.hbm [shape: f32[8,384], index: 11, kind: output, shape index: {2}]
  %12 = xla_tuple %s9, %s10, %s11
  %s13 = sld [smem:[#allocation0]]
  $region94: #{tpu_custom_call.1} parent=0
    _
  %s15 = ssub.s32 1, %s13
  %s16 = scalar_select 0, %s15, %s13
  $region1: #{tpu_custom_call.1} parent=0
    #allocation2 [shape = 'u8[4096]{0}', space=vmem, size = 0x1000, scoped, tag = 'input window, operand 0, single buffered']
    #allocation3 [shape = 's32[1]{0}', space=sflag, size = 0x4, scoped, tag = 'scoped memory for tpu_custom_call.1']
    #allocation4 [shape = 's32[1]{0}', space=sflag, size = 0x4, scoped, tag = 'scoped memory for tpu_custom_call.1']
    #allocation5 [shape = 'u8[4096]{0}', space=vmem, size = 0x1000, scoped, tag = 'input window, operand 1, single buffered']
    #allocation6 [shape = 's32[1]{0}', space=sflag, size = 0x4, scoped, tag = 'scoped memory for tpu_custom_call.1']
    #allocation7 [shape = 'u8[12288]{0}', space=vmem, size = 0x3000, scoped, tag = 'input window, operand 2, single buffered']
    #allocation8 [shape = 'u8[12288]{0}', space=vmem, size = 0x3000, scoped, tag = 'input window, operand 3, single buffered']
    #allocation9 [shape = 's32[1]{0}', space=sflag, size = 0x4, scoped, tag = 'scoped memory for tpu_custom_call.1']
    #allocation10 [shape = 'u8[98304]{0}', space=vmem, size = 0x18000, scoped, tag = 'input window, operand 4, single buffered']
    #allocation11 [shape = 'u8[786432]{0}', space=vmem, size = 0xc0000, scoped, tag = 'input window, operand 5, single buffered']
    #allocation12 [shape = 's32[1]{0}', space=sflag, size = 0x4, scoped, tag = 'scoped memory for tpu_custom_call.1']
    #allocation13 [shape = 'u8[524288]{0}', space=vmem, size = 0x80000, scoped, tag = 'input window, operand 6, single buffered']
    #allocation14 [shape = 'u8[6144]{0}', space=vmem, size = 0x1800, scoped, tag = 'input window, operand 7, single buffered']
    #allocation15 [shape = 's32[1]{0}', space=sflag, size = 0x4, scoped, tag = 'scoped memory for tpu_custom_call.1']
    #allocation16 [shape = 'u8[12288]{0}', space=vmem, size = 0x3000, scoped, tag = 'output window, operand 0, single buffered']
    #allocation17 [shape = 'u8[12288]{0}', space=vmem, size = 0x3000, scoped, tag = 'output window, operand 1, single buffered']
    #allocation18 [shape = 's32[1]{0}', space=sflag, size = 0x4, scoped, tag = 'scoped memory for tpu_custom_call.1']
    #allocation19 [shape = 'u8[12288]{0}', space=vmem, size = 0x3000, scoped, tag = 'output window, operand 2, single buffered']
    %17 = vsyncpa [#allocation3], 0
    %18 = vsyncpa [#allocation6], 0
    %19 = vsyncpa [#allocation9], 0
    %20 = vsyncpa [#allocation12], 0
    %21 = vsyncpa [#allocation15], 0
    %22 = vsyncpa [#allocation4], 0
    %23 = vsyncpa [#allocation18], 0
    // Predicated region
    $region2: #{tpu_custom_call.1} parent=1 // pred_check
      _
    $region3: #{tpu_custom_call.1} parent=1 // pred_check_branch
      %25 = sbr.rel (0) target = $region5
    $region4: #{tpu_custom_call.1} parent=1 // pred_region
      %s27 = ssub.s32 128, 128
      %28 = vsyncadd [#allocation3], %s27
      %s30 = sshll.u32 [#allocation2], 4
      %s31 = int_to_ptr.vmem [resolvable:$true] %s30
      %33 = dma.hbm_to_vmem [thread:$0]  %s0, 128, %s31, [#allocation3]
    $region5: #{tpu_custom_call.1} parent=1 // pred_fallthru
      _
    // Predicated region
    $region6: #{tpu_custom_call.1} parent=1 // pred_check
      _
    $region7: #{tpu_custom_call.1} parent=1 // pred_check_branch
      %35 = sbr.rel (0) target = $region9
    $region8: #{tpu_custom_call.1} parent=1 // pred_region
      %s37 = ssub.s32 128, 128
      %38 = vsyncadd [#allocation6], %s37
      %s40 = sshll.u32 [#allocation5], 4
      %s41 = int_to_ptr.vmem [resolvable:$true] %s40
      %43 = dma.hbm_to_vmem [thread:$0]  %s1, 128, %s41, [#allocation6]
    $region9: #{tpu_custom_call.1} parent=1 // pred_fallthru
      _
    // Predicated region
    $region10: #{tpu_custom_call.1} parent=1 // pred_check
      _
    $region11: #{tpu_custom_call.1} parent=1 // pred_check_branch
      %45 = sbr.rel (0) target = $region13
    $region12: #{tpu_custom_call.1} parent=1 // pred_region
      %s47 = ssub.s32 384, 384
      %48 = vsyncadd [#allocation6], %s47
      %s49 = sshll.u32 [#allocation7], 4
      %s50 = int_to_ptr.vmem [resolvable:$true] %s49
      %55 = dma.hbm_to_vmem [thread:$0]  %s2, 384, %s50, [#allocation6], 128, 128, 8
    $region13: #{tpu_custom_call.1} parent=1 // pred_fallthru
      _
    // Predicated region
    $region14: #{tpu_custom_call.1} parent=1 // pred_check
      _
    $region15: #{tpu_custom_call.1} parent=1 // pred_check_branch
      %57 = sbr.rel (0) target = $region17
    $region16: #{tpu_custom_call.1} parent=1 // pred_region
      %s59 = ssub.s32 384, 384
      %60 = vsyncadd [#allocation9], %s59
      %s61 = sshll.u32 [#allocation8], 4
      %s62 = int_to_ptr.vmem [resolvable:$true] %s61
      %67 = dma.hbm_to_vmem [thread:$0]  %s3, 384, %s62, [#allocation9], 128, 128, 8
    $region17: #{tpu_custom_call.1} parent=1 // pred_fallthru
      _
    // Predicated region
    $region18: #{tpu_custom_call.1} parent=1 // pred_check
      _
    $region19: #{tpu_custom_call.1} parent=1 // pred_check_branch
      %69 = sbr.rel (0) target = $region21
    $region20: #{tpu_custom_call.1} parent=1 // pred_region
      %s71 = ssub.s32 3072, 3072
      %72 = vsyncadd [#allocation9], %s71
      %s73 = sshll.u32 [#allocation10], 4
      %s74 = int_to_ptr.vmem [resolvable:$true] %s73
      %79 = dma.hbm_to_vmem [thread:$0]  %s4, 3072, %s74, [#allocation9], 512, 512, 32
    $region21: #{tpu_custom_call.1} parent=1 // pred_fallthru
      _
    // Predicated region
    $region22: #{tpu_custom_call.1} parent=1 // pred_check
      _
    $region23: #{tpu_custom_call.1} parent=1 // pred_check_branch
      %81 = sbr.rel (0) target = $region25
    $region24: #{tpu_custom_call.1} parent=1 // pred_region
      %s83 = ssub.s32 24576, 24576
      %84 = vsyncadd [#allocation12], %s83
      %s85 = sshll.u32 [#allocation11], 4
      %s86 = int_to_ptr.vmem [resolvable:$true] %s85
      %91 = dma.hbm_to_vmem [thread:$0]  %s5, 24576, %s86, [#allocation12], 512, 512, 32
    $region25: #{tpu_custom_call.1} parent=1 // pred_fallthru
      _
    // Predicated region
    $region26: #{tpu_custom_call.1} parent=1 // pred_check
      _
    $region27: #{tpu_custom_call.1} parent=1 // pred_check_branch
      %93 = sbr.rel (0) target = $region29
    $region28: #{tpu_custom_call.1} parent=1 // pred_region
      %s95 = ssub.s32 16384, 16384
      %96 = vsyncadd [#allocation12], %s95
      %s97 = sshll.u32 [#allocation13], 4
      %s98 = int_to_ptr.vmem [resolvable:$true] %s97
      %103 = dma.hbm_to_vmem [thread:$0]  %s6, 16384, %s98, [#allocation12], 512, 512, 32
    $region29: #{tpu_custom_call.1} parent=1 // pred_fallthru
      _
    // Predicated region
    $region30: #{tpu_custom_call.1} parent=1 // pred_check
      _
    $region31: #{tpu_custom_call.1} parent=1 // pred_check_branch
      %105 = sbr.rel (0) target = $region33
    $region32: #{tpu_custom_call.1} parent=1 // pred_region
      %s107 = ssub.s32 192, 192
      %108 = vsyncadd [#allocation15], %s107
      %s109 = sshll.u32 [#allocation14], 4
      %s110 = int_to_ptr.vmem [resolvable:$true] %s109
      %115 = dma.hbm_to_vmem [thread:$0]  %s7, 192, %s110, [#allocation15], 64, 64, 4
    $region33: #{tpu_custom_call.1} parent=1 // pred_fallthru
      _
    // Predicated region
    $region34: #{tpu_custom_call.1} parent=1 // pred_check
      _
    $region35: #{tpu_custom_call.1} parent=1 // pred_check_branch
      %117 = sbr.rel (0) target = $region37
    $region36: #{tpu_custom_call.1} parent=1 // pred_region
      _
    $region37: #{tpu_custom_call.1} parent=1 // pred_fallthru
      _
    // Predicated region
    $region38: #{tpu_custom_call.1} parent=1 // pred_check
      _
    $region39: #{tpu_custom_call.1} parent=1 // pred_check_branch
      %119 = sbr.rel (0) target = $region41
    $region40: #{tpu_custom_call.1} parent=1 // pred_region
      %120 = dma.done [#allocation3], 128
    $region41: #{tpu_custom_call.1} parent=1 // pred_fallthru
      _
    // Predicated region
    $region42: #{tpu_custom_call.1} parent=1 // pred_check
      _
    $region43: #{tpu_custom_call.1} parent=1 // pred_check_branch
      %122 = sbr.rel (0) target = $region45
    $region44: #{tpu_custom_call.1} parent=1 // pred_region
      %123 = dma.done [#allocation6], 128
    $region45: #{tpu_custom_call.1} parent=1 // pred_fallthru
      _
    // Predicated region
    $region46: #{tpu_custom_call.1} parent=1 // pred_check
      _
    $region47: #{tpu_custom_call.1} parent=1 // pred_check_branch
      %125 = sbr.rel (0) target = $region49
    $region48: #{tpu_custom_call.1} parent=1 // pred_region
      %126 = dma.done [#allocation6], 384
    $region49: #{tpu_custom_call.1} parent=1 // pred_fallthru
      _
    // Predicated region
    $region50: #{tpu_custom_call.1} parent=1 // pred_check
      _
    $region51: #{tpu_custom_call.1} parent=1 // pred_check_branch
      %128 = sbr.rel (0) target = $region53
    $region52: #{tpu_custom_call.1} parent=1 // pred_region
      %129 = dma.done [#allocation9], 384
    $region53: #{tpu_custom_call.1} parent=1 // pred_fallthru
      _
    // Predicated region
    $region54: #{tpu_custom_call.1} parent=1 // pred_check
      _
    $region55: #{tpu_custom_call.1} parent=1 // pred_check_branch
      %131 = sbr.rel (0) target = $region57
    $region56: #{tpu_custom_call.1} parent=1 // pred_region
      %132 = dma.done [#allocation9], 3072
    $region57: #{tpu_custom_call.1} parent=1 // pred_fallthru
      _
    // Predicated region
    $region58: #{tpu_custom_call.1} parent=1 // pred_check
      _
    $region59: #{tpu_custom_call.1} parent=1 // pred_check_branch
      %134 = sbr.rel (0) target = $region61
    $region60: #{tpu_custom_call.1} parent=1 // pred_region
      %135 = dma.done [#allocation12], 24576
    $region61: #{tpu_custom_call.1} parent=1 // pred_fallthru
      _
    // Predicated region
    $region62: #{tpu_custom_call.1} parent=1 // pred_check
      _
    $region63: #{tpu_custom_call.1} parent=1 // pred_check_branch
      %137 = sbr.rel (0) target = $region65
    $region64: #{tpu_custom_call.1} parent=1 // pred_region
      %138 = dma.done [#allocation12], 16384
    $region65: #{tpu_custom_call.1} parent=1 // pred_fallthru
      _
    // Predicated region
    $region66: #{tpu_custom_call.1} parent=1 // pred_check
      _
    $region67: #{tpu_custom_call.1} parent=1 // pred_check_branch
      %140 = sbr.rel (0) target = $region69
    $region68: #{tpu_custom_call.1} parent=1 // pred_region
      %141 = dma.done [#allocation15], 192
    $region69: #{tpu_custom_call.1} parent=1 // pred_fallthru
      _
    %v142 = vld [vmem:[#allocation2] sm:$0xff]
    %v143 = vld [vmem:[#allocation5] sm:$0xff]
    %v144 = vld [vmem:[#allocation10] sm:$0xff]
    %v145 = vld [vmem:[#allocation10 + $0x8] sm:$0xff]
    %v146 = vld [vmem:[#allocation10 + $0x10] sm:$0xff]
    %v147 = vld [vmem:[#allocation10 + $0x18] sm:$0xff]
    %v148 = vld [vmem:[#allocation10 + $0x20] sm:$0xff]
    %v149 = vld [vmem:[#allocation10 + $0x28] sm:$0xff]
    %v150 = vld [vmem:[#allocation10 + $0x30] sm:$0xff]
    %v151 = vld [vmem:[#allocation10 + $0x38] sm:$0xff]
    %v152 = vld [vmem:[#allocation7] sm:$0xff]
    %v153 = vld [vmem:[#allocation11] sm:$0xff]
    %v154 = vld [vmem:[#allocation11 + $0x8] sm:$0xff]
    %v155 = vld [vmem:[#allocation11 + $0x10] sm:$0xff]
    %v156 = vld [vmem:[#allocation11 + $0x18] sm:$0xff]
    %v157 = vld [vmem:[#allocation11 + $0x20] sm:$0xff]
    %v158 = vld [vmem:[#allocation11 + $0x28] sm:$0xff]
    %v159 = vld [vmem:[#allocation11 + $0x30] sm:$0xff]
    %v160 = vld [vmem:[#allocation11 + $0x38] sm:$0xff]
    %v161 = vld [vmem:[#allocation11 + $0x40] sm:$0xff]
    %v162 = vld [vmem:[#allocation11 + $0x48] sm:$0xff]
    %v163 = vld [vmem:[#allocation11 + $0x50] sm:$0xff]
    %v164 = vld [vmem:[#allocation11 + $0x58] sm:$0xff]
    %v165 = vld [vmem:[#allocation11 + $0x60] sm:$0xff]
    %v166 = vld [vmem:[#allocation11 + $0x68] sm:$0xff]
    %v167 = vld [vmem:[#allocation11 + $0x70] sm:$0xff]
    %v168 = vld [vmem:[#allocation11 + $0x78] sm:$0xff]
    %v169 = vld [vmem:[#allocation11 + $0x80] sm:$0xff]
    %v170 = vld [vmem:[#allocation11 + $0x88] sm:$0xff]
    %v171 = vld [vmem:[#allocation11 + $0x90] sm:$0xff]
    %v172 = vld [vmem:[#allocation11 + $0x98] sm:$0xff]
    %v173 = vld [vmem:[#allocation11 + $0xa0] sm:$0xff]
    %v174 = vld [vmem:[#allocation11 + $0xa8] sm:$0xff]
    %v175 = vld [vmem:[#allocation11 + $0xb0] sm:$0xff]
    %v176 = vld [vmem:[#allocation11 + $0xb8] sm:$0xff]
    %v177 = vld [vmem:[#allocation11 + $0xc0] sm:$0xff]
    %v178 = vld [vmem:[#allocation11 + $0xc8] sm:$0xff]
    %v179 = vld [vmem:[#allocation11 + $0xd0] sm:$0xff]
    %v180 = vld [vmem:[#allocation11 + $0xd8] sm:$0xff]
    %v181 = vld [vmem:[#allocation11 + $0xe0] sm:$0xff]
    %v182 = vld [vmem:[#allocation11 + $0xe8] sm:$0xff]
    %v183 = vld [vmem:[#allocation11 + $0xf0] sm:$0xff]
    %v184 = vld [vmem:[#allocation11 + $0xf8] sm:$0xff]
    %v185 = vld [vmem:[#allocation11 + $0x100] sm:$0xff]
    %v186 = vld [vmem:[#allocation11 + $0x108] sm:$0xff]
    %v187 = vld [vmem:[#allocation11 + $0x110] sm:$0xff]
    %v188 = vld [vmem:[#allocation11 + $0x118] sm:$0xff]
    %v189 = vld [vmem:[#allocation11 + $0x120] sm:$0xff]
    %v190 = vld [vmem:[#allocation11 + $0x128] sm:$0xff]
    %v191 = vld [vmem:[#allocation11 + $0x130] sm:$0xff]
    %v192 = vld [vmem:[#allocation11 + $0x138] sm:$0xff]
    %v193 = vld [vmem:[#allocation11 + $0x140] sm:$0xff]
    %v194 = vld [vmem:[#allocation11 + $0x148] sm:$0xff]
    %v195 = vld [vmem:[#allocation11 + $0x150] sm:$0xff]
    %v196 = vld [vmem:[#allocation11 + $0x158] sm:$0xff]
    %v197 = vld [vmem:[#allocation11 + $0x160] sm:$0xff]
    %v198 = vld [vmem:[#allocation11 + $0x168] sm:$0xff]
    %v199 = vld [vmem:[#allocation11 + $0x170] sm:$0xff]
    %v200 = vld [vmem:[#allocation11 + $0x178] sm:$0xff]
    %v201 = vld [vmem:[#allocation11 + $0x180] sm:$0xff]
    %v202 = vld [vmem:[#allocation11 + $0x188] sm:$0xff]
    %v203 = vld [vmem:[#allocation11 + $0x190] sm:$0xff]
    %v204 = vld [vmem:[#allocation11 + $0x198] sm:$0xff]
    %v205 = vld [vmem:[#allocation11 + $0x1a0] sm:$0xff]
    %v206 = vld [vmem:[#allocation11 + $0x1a8] sm:$0xff]
    %v207 = vld [vmem:[#allocation11 + $0x1b0] sm:$0xff]
    %v208 = vld [vmem:[#allocation11 + $0x1b8] sm:$0xff]
    %v209 = vld [vmem:[#allocation11 + $0x1c0] sm:$0xff]
    %v210 = vld [vmem:[#allocation11 + $0x1c8] sm:$0xff]
    %v211 = vld [vmem:[#allocation11 + $0x1d0] sm:$0xff]
    %v212 = vld [vmem:[#allocation11 + $0x1d8] sm:$0xff]
    %v213 = vld [vmem:[#allocation11 + $0x1e0] sm:$0xff]
    %v214 = vld [vmem:[#allocation11 + $0x1e8] sm:$0xff]
    %v215 = vld [vmem:[#allocation11 + $0x1f0] sm:$0xff]
    %v216 = vld [vmem:[#allocation11 + $0x1f8] sm:$0xff]
    %217 = vmatprep.subr.mxu0 %v154
    %218 = vmatpush1.msra.mxu0 %v153
    %219 = vmatprep.subr.mxu0 %v158
    %220 = vmatpush1.msra.mxu0 %v157
    %221 = vmatprep.subr.mxu0 %v162
    %222 = vmatpush1.msra.mxu0 %v161
    %223 = vmatprep.subr.mxu0 %v166
    %224 = vmatpush1.msra.mxu0 %v165
    %225 = vmatprep.subr.mxu0 %v170
    %226 = vmatpush1.msra.mxu0 %v169
    %227 = vmatprep.subr.mxu0 %v174
    %228 = vmatpush1.msra.mxu0 %v173
    %229 = vmatprep.subr.mxu0 %v178
    %230 = vmatpush1.msra.mxu0 %v177
    %231 = vmatprep.subr.mxu0 %v182
    %232 = vmatpush1.msra.mxu0 %v181
    %233 = vmatprep.subr.mxu0 %v186
    %234 = vmatpush1.msra.mxu0 %v185
    %235 = vmatprep.subr.mxu0 %v190
    %236 = vmatpush1.msra.mxu0 %v189
    %237 = vmatprep.subr.mxu0 %v194
    %238 = vmatpush1.msra.mxu0 %v193
    %239 = vmatprep.subr.mxu0 %v198
    %240 = vmatpush1.msra.mxu0 %v197
    %241 = vmatprep.subr.mxu0 %v202
    %242 = vmatpush1.msra.mxu0 %v201
    %243 = vmatprep.subr.mxu0 %v206
    %244 = vmatpush1.msra.mxu0 %v205
    %245 = vmatprep.subr.mxu0 %v210
    %246 = vmatpush1.msra.mxu0 %v209
    %247 = vmatprep.subr.mxu0 %v214
    %248 = vmatpush1.msra.mxu0 %v213
    %249 = vmatprep.subr.mxu0 0.0
    %250 = vmatpush1.msra.mxu0 0.0
    %251 = vmatprep.subr.mxu0 0.0
    %252 = vmatpush1.msra.mxu0 0.0
    %253 = vmatprep.subr.mxu0 0.0
    %254 = vmatpush1.msra.mxu0 0.0
    %255 = vmatprep.subr.mxu0 0.0
    %256 = vmatpush1.msra.mxu0 0.0
    %257 = vmatprep.subr.mxu0 0.0
    %258 = vmatpush1.msra.mxu0 0.0
    %259 = vmatprep.subr.mxu0 0.0
    %260 = vmatpush1.msra.mxu0 0.0
    %261 = vmatprep.subr.mxu0 0.0
    %262 = vmatpush1.msra.mxu0 0.0
    %263 = vmatprep.subr.mxu0 0.0
    %264 = vmatpush1.msra.mxu0 0.0
    %265 = vmatprep.subr.mxu0 0.0
    %266 = vmatpush1.msra.mxu0 0.0
    %267 = vmatprep.subr.mxu0 0.0
    %268 = vmatpush1.msra.mxu0 0.0
    %269 = vmatprep.subr.mxu0 0.0
    %270 = vmatpush1.msra.mxu0 0.0
    %271 = vmatprep.subr.mxu0 0.0
    %272 = vmatpush1.msra.mxu0 0.0
    %273 = vmatprep.subr.mxu0 0.0
    %274 = vmatpush1.msra.mxu0 0.0
    %275 = vmatprep.subr.mxu0 0.0
    %276 = vmatpush1.msra.mxu0 0.0
    %277 = vmatprep.subr.mxu0 0.0
    %278 = vmatpush1.msra.mxu0 0.0
    %279 = vmatprep.subr.mxu0 0.0
    %280 = vmatpush1.msra.mxu0 0.0
    %281 = vmatprep.mubr.f32.mxu0 0.0
    %282 = vmatmul.mubr.f32.gmra.mrb[0].mxu0 %v152
    %v283 = vpop.f32.mrb[0].mxu0
    %v284 = vadd.f32 0.0, %v283
    %v285 = vpop.f32.mrb[0].mxu0
    %v286 = vadd.f32 0.0, %v285
    %287 = vdwg.mxu0
    %288 = vmatprep.subr.mxu0 %v156
    %289 = vmatpush1.msra.mxu0 %v155
    %290 = vmatprep.subr.mxu0 %v160
    %291 = vmatpush1.msra.mxu0 %v159
    %292 = vmatprep.subr.mxu0 %v164
    %293 = vmatpush1.msra.mxu0 %v163
    %294 = vmatprep.subr.mxu0 %v168
    %295 = vmatpush1.msra.mxu0 %v167
    %296 = vmatprep.subr.mxu0 %v172
    %297 = vmatpush1.msra.mxu0 %v171
    %298 = vmatprep.subr.mxu0 %v176
    %299 = vmatpush1.msra.mxu0 %v175
    %300 = vmatprep.subr.mxu0 %v180
    %301 = vmatpush1.msra.mxu0 %v179
    %302 = vmatprep.subr.mxu0 %v184
    %303 = vmatpush1.msra.mxu0 %v183
    %304 = vmatprep.subr.mxu0 %v188
    %305 = vmatpush1.msra.mxu0 %v187
    %306 = vmatprep.subr.mxu0 %v192
    %307 = vmatpush1.msra.mxu0 %v191
    %308 = vmatprep.subr.mxu0 %v196
    %309 = vmatpush1.msra.mxu0 %v195
    %310 = vmatprep.subr.mxu0 %v200
    %311 = vmatpush1.msra.mxu0 %v199
    %312 = vmatprep.subr.mxu0 %v204
    %313 = vmatpush1.msra.mxu0 %v203
    %314 = vmatprep.subr.mxu0 %v208
    %315 = vmatpush1.msra.mxu0 %v207
    %316 = vmatprep.subr.mxu0 %v212
    %317 = vmatpush1.msra.mxu0 %v211
    %318 = vmatprep.subr.mxu0 %v216
    %319 = vmatpush1.msra.mxu0 %v215
    %320 = vmatprep.subr.mxu0 0.0
    %321 = vmatpush1.msra.mxu0 0.0
    %322 = vmatprep.subr.mxu0 0.0
    %323 = vmatpush1.msra.mxu0 0.0
    %324 = vmatprep.subr.mxu0 0.0
    %325 = vmatpush1.msra.mxu0 0.0
    %326 = vmatprep.subr.mxu0 0.0
    %327 = vmatpush1.msra.mxu0 0.0
    %328 = vmatprep.subr.mxu0 0.0
    %329 = vmatpush1.msra.mxu0 0.0
    %330 = vmatprep.subr.mxu0 0.0
    %331 = vmatpush1.msra.mxu0 0.0
    %332 = vmatprep.subr.mxu0 0.0
    %333 = vmatpush1.msra.mxu0 0.0
    %334 = vmatprep.subr.mxu0 0.0
    %335 = vmatpush1.msra.mxu0 0.0
    %336 = vmatprep.subr.mxu0 0.0
    %337 = vmatpush1.msra.mxu0 0.0
    %338 = vmatprep.subr.mxu0 0.0
    %339 = vmatpush1.msra.mxu0 0.0
    %340 = vmatprep.subr.mxu0 0.0
    %341 = vmatpush1.msra.mxu0 0.0
    %342 = vmatprep.subr.mxu0 0.0
    %343 = vmatpush1.msra.mxu0 0.0
    %344 = vmatprep.subr.mxu0 0.0
    %345 = vmatpush1.msra.mxu0 0.0
    %346 = vmatprep.subr.mxu0 0.0
    %347 = vmatpush1.msra.mxu0 0.0
    %348 = vmatprep.subr.mxu0 0.0
    %349 = vmatpush1.msra.mxu0 0.0
    %350 = vmatprep.subr.mxu0 0.0
    %351 = vmatpush1.msra.mxu0 0.0
    %352 = vmatprep.mubr.f32.mxu0 0.0
    %353 = vmatmul.mubr.f32.gmra.mrb[0].mxu0 %v152
    %v354 = vpop.f32.mrb[0].mxu0
    %v355 = vadd.f32 0.0, %v354
    %v356 = vpop.f32.mrb[0].mxu0
    %v357 = vadd.f32 0.0, %v356
    %358 = vdwg.mxu0
    %vm359 = vcmask 130048
    %v361 = vsel %vm359, %v142, 0
    %363 = vmatprep.subr.mxu0 %v145
    %364 = vmatpush1.msra.mxu0 %v144
    %365 = vmatprep.subr.mxu0 %v149
    %366 = vmatpush1.msra.mxu0 %v148
    %367 = vmatprep.subr.mxu0 0.0
    %368 = vmatpush1.msra.mxu0 0.0
    %369 = vmatprep.subr.mxu0 0.0
    %370 = vmatpush1.msra.mxu0 0.0
    %371 = vmatprep.subr.mxu0 0.0
    %372 = vmatpush1.msra.mxu0 0.0
    %373 = vmatprep.subr.mxu0 0.0
    %374 = vmatpush1.msra.mxu0 0.0
    %375 = vmatprep.subr.mxu0 0.0
    %376 = vmatpush1.msra.mxu0 0.0
    %377 = vmatprep.subr.mxu0 0.0
    %378 = vmatpush1.msra.mxu0 0.0
    %379 = vmatprep.subr.mxu0 0.0
    %380 = vmatpush1.msra.mxu0 0.0
    %381 = vmatprep.subr.mxu0 0.0
    %382 = vmatpush1.msra.mxu0 0.0
    %383 = vmatprep.subr.mxu0 0.0
    %384 = vmatpush1.msra.mxu0 0.0
    %385 = vmatprep.subr.mxu0 0.0
    %386 = vmatpush1.msra.mxu0 0.0
    %387 = vmatprep.subr.mxu0 0.0
    %388 = vmatpush1.msra.mxu0 0.0
    %389 = vmatprep.subr.mxu0 0.0
    %390 = vmatpush1.msra.mxu0 0.0
    %391 = vmatprep.subr.mxu0 0.0
    %392 = vmatpush1.msra.mxu0 0.0
    %393 = vmatprep.subr.mxu0 0.0
    %394 = vmatpush1.msra.mxu0 0.0
    %395 = vmatprep.subr.mxu0 0.0
    %396 = vmatpush1.msra.mxu0 0.0
    %397 = vmatprep.subr.mxu0 0.0
    %398 = vmatpush1.msra.mxu0 0.0
    %399 = vmatprep.subr.mxu0 0.0
    %400 = vmatpush1.msra.mxu0 0.0
    %401 = vmatprep.subr.mxu0 0.0
    %402 = vmatpush1.msra.mxu0 0.0
    %403 = vmatprep.subr.mxu0 0.0
    %404 = vmatpush1.msra.mxu0 0.0
    %405 = vmatprep.subr.mxu0 0.0
    %406 = vmatpush1.msra.mxu0 0.0
    %407 = vmatprep.subr.mxu0 0.0
    %408 = vmatpush1.msra.mxu0 0.0
    %409 = vmatprep.subr.mxu0 0.0
    %410 = vmatpush1.msra.mxu0 0.0
    %411 = vmatprep.subr.mxu0 0.0
    %412 = vmatpush1.msra.mxu0 0.0
    %413 = vmatprep.subr.mxu0 0.0
    %414 = vmatpush1.msra.mxu0 0.0
    %415 = vmatprep.subr.mxu0 0.0
    %416 = vmatpush1.msra.mxu0 0.0
    %417 = vmatprep.subr.mxu0 0.0
    %418 = vmatpush1.msra.mxu0 0.0
    %419 = vmatprep.subr.mxu0 0.0
    %420 = vmatpush1.msra.mxu0 0.0
    %421 = vmatprep.subr.mxu0 0.0
    %422 = vmatpush1.msra.mxu0 0.0
    %423 = vmatprep.subr.mxu0 0.0
    %424 = vmatpush1.msra.mxu0 0.0
    %425 = vmatprep.subr.mxu0 0.0
    %426 = vmatpush1.msra.mxu0 0.0
    %427 = vmatprep.mubr.f32.mxu0 0.0
    %428 = vmatmul.mubr.f32.gmra.mrb[0].mxu0 %v361
    %v429 = vpop.f32.mrb[0].mxu0
    %v430 = vadd.f32 %v284, %v429
    %v431 = vpop.f32.mrb[0].mxu0
    %v432 = vadd.f32 %v286, %v431
    %433 = vdwg.mxu0
    %434 = vmatprep.subr.mxu0 %v147
    %435 = vmatpush1.msra.mxu0 %v146
    %436 = vmatprep.subr.mxu0 %v151
    %437 = vmatpush1.msra.mxu0 %v150
    %438 = vmatprep.subr.mxu0 0.0
    %439 = vmatpush1.msra.mxu0 0.0
    %440 = vmatprep.subr.mxu0 0.0
    %441 = vmatpush1.msra.mxu0 0.0
    %442 = vmatprep.subr.mxu0 0.0
    %443 = vmatpush1.msra.mxu0 0.0
    %444 = vmatprep.subr.mxu0 0.0
    %445 = vmatpush1.msra.mxu0 0.0
    %446 = vmatprep.subr.mxu0 0.0
    %447 = vmatpush1.msra.mxu0 0.0
    %448 = vmatprep.subr.mxu0 0.0
    %449 = vmatpush1.msra.mxu0 0.0
    %450 = vmatprep.subr.mxu0 0.0
    %451 = vmatpush1.msra.mxu0 0.0
    %452 = vmatprep.subr.mxu0 0.0
    %453 = vmatpush1.msra.mxu0 0.0
    %454 = vmatprep.subr.mxu0 0.0
    %455 = vmatpush1.msra.mxu0 0.0
    %456 = vmatprep.subr.mxu0 0.0
    %457 = vmatpush1.msra.mxu0 0.0
    %458 = vmatprep.subr.mxu0 0.0
    %459 = vmatpush1.msra.mxu0 0.0
    %460 = vmatprep.subr.mxu0 0.0
    %461 = vmatpush1.msra.mxu0 0.0
    %462 = vmatprep.subr.mxu0 0.0
    %463 = vmatpush1.msra.mxu0 0.0
    %464 = vmatprep.subr.mxu0 0.0
    %465 = vmatpush1.msra.mxu0 0.0
    %466 = vmatprep.subr.mxu0 0.0
    %467 = vmatpush1.msra.mxu0 0.0
    %468 = vmatprep.subr.mxu0 0.0
    %469 = vmatpush1.msra.mxu0 0.0
    %470 = vmatprep.subr.mxu0 0.0
    %471 = vmatpush1.msra.mxu0 0.0
    %472 = vmatprep.subr.mxu0 0.0
    %473 = vmatpush1.msra.mxu0 0.0
    %474 = vmatprep.subr.mxu0 0.0
    %475 = vmatpush1.msra.mxu0 0.0
    %476 = vmatprep.subr.mxu0 0.0
    %477 = vmatpush1.msra.mxu0 0.0
    %478 = vmatprep.subr.mxu0 0.0
    %479 = vmatpush1.msra.mxu0 0.0
    %480 = vmatprep.subr.mxu0 0.0
    %481 = vmatpush1.msra.mxu0 0.0
    %482 = vmatprep.subr.mxu0 0.0
    %483 = vmatpush1.msra.mxu0 0.0
    %484 = vmatprep.subr.mxu0 0.0
    %485 = vmatpush1.msra.mxu0 0.0
    %486 = vmatprep.subr.mxu0 0.0
    %487 = vmatpush1.msra.mxu0 0.0
    %488 = vmatprep.subr.mxu0 0.0
    %489 = vmatpush1.msra.mxu0 0.0
    %490 = vmatprep.subr.mxu0 0.0
    %491 = vmatpush1.msra.mxu0 0.0
    %492 = vmatprep.subr.mxu0 0.0
    %493 = vmatpush1.msra.mxu0 0.0
    %494 = vmatprep.subr.mxu0 0.0
    %495 = vmatpush1.msra.mxu0 0.0
    %496 = vmatprep.subr.mxu0 0.0
    %497 = vmatpush1.msra.mxu0 0.0
    %498 = vmatprep.mubr.f32.mxu0 0.0
    %499 = vmatmul.mubr.f32.gmra.mrb[0].mxu0 %v361
    %v500 = vpop.f32.mrb[0].mxu0
    %v501 = vadd.f32 %v355, %v500
    %v502 = vpop.f32.mrb[0].mxu0
    %v503 = vadd.f32 %v357, %v502
    %504 = vdwg.mxu0
    %v505 = vld [vmem:[#allocation14] sm:$0xf]
    %v507 = vlaneseq
    %v508 = vshrl.u32 %v507, 7
    %v509 = vsub.s32 0, %v508
    %v510 = vrot.slane %v505, %v509
    %v511 = vlaneseq
    %v512 = vshrl.u32 %v511, 7
    %v513 = vsub.s32 1, %v512
    %v514 = vrot.slane %v505, %v513
    %v515 = vlaneseq
    %v516 = vshrl.u32 %v515, 7
    %v517 = vsub.s32 2, %v516
    %v518 = vrot.slane %v505, %v517
    %v519 = vlaneseq
    %v520 = vshrl.u32 %v519, 7
    %v521 = vsub.s32 3, %v520
    %v522 = vrot.slane %v505, %v521
    %v527 = vadd.f32 %v430, %v510
    %v528 = vadd.f32 %v432, %v514
    %v529 = vadd.f32 %v501, %v518
    %v530 = vadd.f32 %v503, %v522
    %v531 = vld [vmem:[%s8] sm:$0xff]
    %vm532 = vcmask 64512
    %v534 = vsel %vm532, %v143, 0
    %536 = vmatprep.subr.mxu0 0.0
    %537 = vmatpush1.msra.mxu0 %v531
    %538 = vmatprep.subr.mxu0 0.0
    %539 = vmatpush1.msra.mxu0 0.0
    %540 = vmatprep.subr.mxu0 0.0
    %541 = vmatpush1.msra.mxu0 0.0
    %542 = vmatprep.subr.mxu0 0.0
    %543 = vmatpush1.msra.mxu0 0.0
    %544 = vmatprep.subr.mxu0 0.0
    %545 = vmatpush1.msra.mxu0 0.0
    %546 = vmatprep.subr.mxu0 0.0
    %547 = vmatpush1.msra.mxu0 0.0
    %548 = vmatprep.subr.mxu0 0.0
    %549 = vmatpush1.msra.mxu0 0.0
    %550 = vmatprep.subr.mxu0 0.0
    %551 = vmatpush1.msra.mxu0 0.0
    %552 = vmatprep.subr.mxu0 0.0
    %553 = vmatpush1.msra.mxu0 0.0
    %554 = vmatprep.subr.mxu0 0.0
    %555 = vmatpush1.msra.mxu0 0.0
    %556 = vmatprep.subr.mxu0 0.0
    %557 = vmatpush1.msra.mxu0 0.0
    %558 = vmatprep.subr.mxu0 0.0
    %559 = vmatpush1.msra.mxu0 0.0
    %560 = vmatprep.subr.mxu0 0.0
    %561 = vmatpush1.msra.mxu0 0.0
    %562 = vmatprep.subr.mxu0 0.0
    %563 = vmatpush1.msra.mxu0 0.0
    %564 = vmatprep.subr.mxu0 0.0
    %565 = vmatpush1.msra.mxu0 0.0
    %566 = vmatprep.subr.mxu0 0.0
    %567 = vmatpush1.msra.mxu0 0.0
    %568 = vmatprep.subr.mxu0 0.0
    %569 = vmatpush1.msra.mxu0 0.0
    %570 = vmatprep.subr.mxu0 0.0
    %571 = vmatpush1.msra.mxu0 0.0
    %572 = vmatprep.subr.mxu0 0.0
    %573 = vmatpush1.msra.mxu0 0.0
    %574 = vmatprep.subr.mxu0 0.0
    %575 = vmatpush1.msra.mxu0 0.0
    %576 = vmatprep.subr.mxu0 0.0
    %577 = vmatpush1.msra.mxu0 0.0
    %578 = vmatprep.subr.mxu0 0.0
    %579 = vmatpush1.msra.mxu0 0.0
    %580 = vmatprep.subr.mxu0 0.0
    %581 = vmatpush1.msra.mxu0 0.0
    %582 = vmatprep.subr.mxu0 0.0
    %583 = vmatpush1.msra.mxu0 0.0
    %584 = vmatprep.subr.mxu0 0.0
    %585 = vmatpush1.msra.mxu0 0.0
    %586 = vmatprep.subr.mxu0 0.0
    %587 = vmatpush1.msra.mxu0 0.0
    %588 = vmatprep.subr.mxu0 0.0
    %589 = vmatpush1.msra.mxu0 0.0
    %590 = vmatprep.subr.mxu0 0.0
    %591 = vmatpush1.msra.mxu0 0.0
    %592 = vmatprep.subr.mxu0 0.0
    %593 = vmatpush1.msra.mxu0 0.0
    %594 = vmatprep.subr.mxu0 0.0
    %595 = vmatpush1.msra.mxu0 0.0
    %596 = vmatprep.subr.mxu0 0.0
    %597 = vmatpush1.msra.mxu0 0.0
    %598 = vmatprep.subr.mxu0 0.0
    %599 = vmatpush1.msra.mxu0 0.0
    %600 = vmatprep.mubr.f32.mxu0 0.0
    %601 = vmatmul.mubr.f32.gmra.mrb[0].mxu0 %v534
    %v602 = vpop.f32.mrb[0].mxu0
    %v603 = vadd.f32 0.0, %v602
    %v604 = vpop.f32.mrb[0].mxu0
    %605 = vdwg.mxu0
    %v606 = vtanh.pop %v603
    %v607 = vld [vmem:[#allocation8] sm:$0xff]
    %v608 = vxor.u32 %v527, 2147483648
    %v609 = vmul.f32 %v608, 1.442695
    %v610 = vpow.pop %v609
    %v611 = vadd.f32 %v610, 1.0
    %v612 = vrcp.pop %v611
    %v613 = vmul.f32 1.0, %v612
    %v614 = vxor.u32 %v528, 2147483648
    %v615 = vmul.f32 %v614, 1.442695
    %v616 = vpow.pop %v615
    %v617 = vadd.f32 %v616, 1.0
    %v618 = vrcp.pop %v617
    %v619 = vmul.f32 1.0, %v618
    %v620 = vtanh.pop %v529
    %v621 = vxor.u32 %v530, 2147483648
    %v622 = vmul.f32 %v621, 1.442695
    %v623 = vpow.pop %v622
    %v624 = vadd.f32 %v623, 1.0
    %v625 = vrcp.pop %v624
    %v626 = vmul.f32 1.0, %v625
    %v627 = vmul.f32 %v619, %v607
    %v628 = vmul.f32 %v613, %v620
    %v629 = vadd.f32 %v627, %v628
    %v630 = vadd.f32 %v629, %v606
    %v631 = vtanh.pop %v630
    %v632 = vmul.f32 %v626, %v631
    %633 = vst [vmem:[#allocation16] sm:$0xff] %v632
    %634 = vst [vmem:[#allocation17] sm:$0xff] %v630
    %635 = vst [vmem:[#allocation19] sm:$0xff] %v632
    %s636 = scalar_lea.vmem [#allocation10], 64
    %v637 = vld [vmem:[%s636] sm:$0xff]
    %v638 = vld [vmem:[%s636 + $0x8] sm:$0xff]
    %v639 = vld [vmem:[%s636 + $0x10] sm:$0xff]
    %v640 = vld [vmem:[%s636 + $0x18] sm:$0xff]
    %v641 = vld [vmem:[%s636 + $0x20] sm:$0xff]
    %v642 = vld [vmem:[%s636 + $0x28] sm:$0xff]
    %v643 = vld [vmem:[%s636 + $0x30] sm:$0xff]
    %v644 = vld [vmem:[%s636 + $0x38] sm:$0xff]
    %s645 = scalar_lea.vmem [#allocation7], 8
    %v646 = vld [vmem:[%s645] sm:$0xff]
    %s647 = scalar_lea.vmem [#allocation11], 512
    %v648 = vld [vmem:[%s647] sm:$0xff]
    %v649 = vld [vmem:[%s647 + $0x8] sm:$0xff]
    %v650 = vld [vmem:[%s647 + $0x10] sm:$0xff]
    %v651 = vld [vmem:[%s647 + $0x18] sm:$0xff]
    %v652 = vld [vmem:[%s647 + $0x20] sm:$0xff]
    %v653 = vld [vmem:[%s647 + $0x28] sm:$0xff]
    %v654 = vld [vmem:[%s647 + $0x30] sm:$0xff]
    %v655 = vld [vmem:[%s647 + $0x38] sm:$0xff]
    %v656 = vld [vmem:[%s647 + $0x40] sm:$0xff]
    %v657 = vld [vmem:[%s647 + $0x48] sm:$0xff]
    %v658 = vld [vmem:[%s647 + $0x50] sm:$0xff]
    %v659 = vld [vmem:[%s647 + $0x58] sm:$0xff]
    %v660 = vld [vmem:[%s647 + $0x60] sm:$0xff]
    %v661 = vld [vmem:[%s647 + $0x68] sm:$0xff]
    %v662 = vld [vmem:[%s647 + $0x70] sm:$0xff]
    %v663 = vld [vmem:[%s647 + $0x78] sm:$0xff]
    %v664 = vld [vmem:[%s647 + $0x80] sm:$0xff]
    %v665 = vld [vmem:[%s647 + $0x88] sm:$0xff]
    %v666 = vld [vmem:[%s647 + $0x90] sm:$0xff]
    %v667 = vld [vmem:[%s647 + $0x98] sm:$0xff]
    %v668 = vld [vmem:[%s647 + $0xa0] sm:$0xff]
    %v669 = vld [vmem:[%s647 + $0xa8] sm:$0xff]
    %v670 = vld [vmem:[%s647 + $0xb0] sm:$0xff]
    %v671 = vld [vmem:[%s647 + $0xb8] sm:$0xff]
    %v672 = vld [vmem:[%s647 + $0xc0] sm:$0xff]
    %v673 = vld [vmem:[%s647 + $0xc8] sm:$0xff]
    %v674 = vld [vmem:[%s647 + $0xd0] sm:$0xff]
    %v675 = vld [vmem:[%s647 + $0xd8] sm:$0xff]
    %v676 = vld [vmem:[%s647 + $0xe0] sm:$0xff]
    %v677 = vld [vmem:[%s647 + $0xe8] sm:$0xff]
    %v678 = vld [vmem:[%s647 + $0xf0] sm:$0xff]
    %v679 = vld [vmem:[%s647 + $0xf8] sm:$0xff]
    %v680 = vld [vmem:[%s647 + $0x100] sm:$0xff]
    %v681 = vld [vmem:[%s647 + $0x108] sm:$0xff]
    %v682 = vld [vmem:[%s647 + $0x110] sm:$0xff]
    %v683 = vld [vmem:[%s647 + $0x118] sm:$0xff]
    %v684 = vld [vmem:[%s647 + $0x120] sm:$0xff]
    %v685 = vld [vmem:[%s647 + $0x128] sm:$0xff]
    %v686 = vld [vmem:[%s647 + $0x130] sm:$0xff]
    %v687 = vld [vmem:[%s647 + $0x138] sm:$0xff]
    %v688 = vld [vmem:[%s647 + $0x140] sm:$0xff]
    %v689 = vld [vmem:[%s647 + $0x148] sm:$0xff]
    %v690 = vld [vmem:[%s647 + $0x150] sm:$0xff]
    %v691 = vld [vmem:[%s647 + $0x158] sm:$0xff]
    %v692 = vld [vmem:[%s647 + $0x160] sm:$0xff]
    %v693 = vld [vmem:[%s647 + $0x168] sm:$0xff]
    %v694 = vld [vmem:[%s647 + $0x170] sm:$0xff]
    %v695 = vld [vmem:[%s647 + $0x178] sm:$0xff]
    %v696 = vld [vmem:[%s647 + $0x180] sm:$0xff]
    %v697 = vld [vmem:[%s647 + $0x188] sm:$0xff]
    %v698 = vld [vmem:[%s647 + $0x190] sm:$0xff]
    %v699 = vld [vmem:[%s647 + $0x198] sm:$0xff]
    %v700 = vld [vmem:[%s647 + $0x1a0] sm:$0xff]
    %v701 = vld [vmem:[%s647 + $0x1a8] sm:$0xff]
    %v702 = vld [vmem:[%s647 + $0x1b0] sm:$0xff]
    %v703 = vld [vmem:[%s647 + $0x1b8] sm:$0xff]
    %v704 = vld [vmem:[%s647 + $0x1c0] sm:$0xff]
    %v705 = vld [vmem:[%s647 + $0x1c8] sm:$0xff]
    %v706 = vld [vmem:[%s647 + $0x1d0] sm:$0xff]
    %v707 = vld [vmem:[%s647 + $0x1d8] sm:$0xff]
    %v708 = vld [vmem:[%s647 + $0x1e0] sm:$0xff]
    %v709 = vld [vmem:[%s647 + $0x1e8] sm:$0xff]
    %v710 = vld [vmem:[%s647 + $0x1f0] sm:$0xff]
    %v711 = vld [vmem:[%s647 + $0x1f8] sm:$0xff]
    %712 = vmatprep.subr.mxu0 %v649
    %713 = vmatpush1.msra.mxu0 %v648
    %714 = vmatprep.subr.mxu0 %v653
    %715 = vmatpush1.msra.mxu0 %v652
    %716 = vmatprep.subr.mxu0 %v657
    %717 = vmatpush1.msra.mxu0 %v656
    %718 = vmatprep.subr.mxu0 %v661
    %719 = vmatpush1.msra.mxu0 %v660
    %720 = vmatprep.subr.mxu0 %v665
    %721 = vmatpush1.msra.mxu0 %v664
    %722 = vmatprep.subr.mxu0 %v669
    %723 = vmatpush1.msra.mxu0 %v668
    %724 = vmatprep.subr.mxu0 %v673
    %725 = vmatpush1.msra.mxu0 %v672
    %726 = vmatprep.subr.mxu0 %v677
    %727 = vmatpush1.msra.mxu0 %v676
    %728 = vmatprep.subr.mxu0 %v681
    %729 = vmatpush1.msra.mxu0 %v680
    %730 = vmatprep.subr.mxu0 %v685
    %731 = vmatpush1.msra.mxu0 %v684
    %732 = vmatprep.subr.mxu0 %v689
    %733 = vmatpush1.msra.mxu0 %v688
    %734 = vmatprep.subr.mxu0 %v693
    %735 = vmatpush1.msra.mxu0 %v692
    %736 = vmatprep.subr.mxu0 %v697
    %737 = vmatpush1.msra.mxu0 %v696
    %738 = vmatprep.subr.mxu0 %v701
    %739 = vmatpush1.msra.mxu0 %v700
    %740 = vmatprep.subr.mxu0 %v705
    %741 = vmatpush1.msra.mxu0 %v704
    %742 = vmatprep.subr.mxu0 %v709
    %743 = vmatpush1.msra.mxu0 %v708
    %744 = vmatprep.subr.mxu0 0.0
    %745 = vmatpush1.msra.mxu0 0.0
    %746 = vmatprep.subr.mxu0 0.0
    %747 = vmatpush1.msra.mxu0 0.0
    %748 = vmatprep.subr.mxu0 0.0
    %749 = vmatpush1.msra.mxu0 0.0
    %750 = vmatprep.subr.mxu0 0.0
    %751 = vmatpush1.msra.mxu0 0.0
    %752 = vmatprep.subr.mxu0 0.0
    %753 = vmatpush1.msra.mxu0 0.0
    %754 = vmatprep.subr.mxu0 0.0
    %755 = vmatpush1.msra.mxu0 0.0
    %756 = vmatprep.subr.mxu0 0.0
    %757 = vmatpush1.msra.mxu0 0.0
    %758 = vmatprep.subr.mxu0 0.0
    %759 = vmatpush1.msra.mxu0 0.0
    %760 = vmatprep.subr.mxu0 0.0
    %761 = vmatpush1.msra.mxu0 0.0
    %762 = vmatprep.subr.mxu0 0.0
    %763 = vmatpush1.msra.mxu0 0.0
    %764 = vmatprep.subr.mxu0 0.0
    %765 = vmatpush1.msra.mxu0 0.0
    %766 = vmatprep.subr.mxu0 0.0
    %767 = vmatpush1.msra.mxu0 0.0
    %768 = vmatprep.subr.mxu0 0.0
    %769 = vmatpush1.msra.mxu0 0.0
    %770 = vmatprep.subr.mxu0 0.0
    %771 = vmatpush1.msra.mxu0 0.0
    %772 = vmatprep.subr.mxu0 0.0
    %773 = vmatpush1.msra.mxu0 0.0
    %774 = vmatprep.subr.mxu0 0.0
    %775 = vmatpush1.msra.mxu0 0.0
    %776 = vmatprep.mubr.f32.mxu0 0.0
    %777 = vmatmul.mubr.f32.gmra.mrb[0].mxu0 %v646
    %v778 = vpop.f32.mrb[0].mxu0
    %v779 = vadd.f32 0.0, %v778
    %v780 = vpop.f32.mrb[0].mxu0
    %v781 = vadd.f32 0.0, %v780
    %782 = vdwg.mxu0
    %783 = vmatprep.subr.mxu0 %v651
    %784 = vmatpush1.msra.mxu0 %v650
    %785 = vmatprep.subr.mxu0 %v655
    %786 = vmatpush1.msra.mxu0 %v654
    %787 = vmatprep.subr.mxu0 %v659
    %788 = vmatpush1.msra.mxu0 %v658
    %789 = vmatprep.subr.mxu0 %v663
    %790 = vmatpush1.msra.mxu0 %v662
    %791 = vmatprep.subr.mxu0 %v667
    %792 = vmatpush1.msra.mxu0 %v666
    %793 = vmatprep.subr.mxu0 %v671
    %794 = vmatpush1.msra.mxu0 %v670
    %795 = vmatprep.subr.mxu0 %v675
    %796 = vmatpush1.msra.mxu0 %v674
    %797 = vmatprep.subr.mxu0 %v679
    %798 = vmatpush1.msra.mxu0 %v678
    %799 = vmatprep.subr.mxu0 %v683
    %800 = vmatpush1.msra.mxu0 %v682
    %801 = vmatprep.subr.mxu0 %v687
    %802 = vmatpush1.msra.mxu0 %v686
    %803 = vmatprep.subr.mxu0 %v691
    %804 = vmatpush1.msra.mxu0 %v690
    %805 = vmatprep.subr.mxu0 %v695
    %806 = vmatpush1.msra.mxu0 %v694
    %807 = vmatprep.subr.mxu0 %v699
    %808 = vmatpush1.msra.mxu0 %v698
    %809 = vmatprep.subr.mxu0 %v703
    %810 = vmatpush1.msra.mxu0 %v702
    %811 = vmatprep.subr.mxu0 %v707
    %812 = vmatpush1.msra.mxu0 %v706
    %813 = vmatprep.subr.mxu0 %v711
    %814 = vmatpush1.msra.mxu0 %v710
    %815 = vmatprep.subr.mxu0 0.0
    %816 = vmatpush1.msra.mxu0 0.0
    %817 = vmatprep.subr.mxu0 0.0
    %818 = vmatpush1.msra.mxu0 0.0
    %819 = vmatprep.subr.mxu0 0.0
    %820 = vmatpush1.msra.mxu0 0.0
    %821 = vmatprep.subr.mxu0 0.0
    %822 = vmatpush1.msra.mxu0 0.0
    %823 = vmatprep.subr.mxu0 0.0
    %824 = vmatpush1.msra.mxu0 0.0
    %825 = vmatprep.subr.mxu0 0.0
    %826 = vmatpush1.msra.mxu0 0.0
    %827 = vmatprep.subr.mxu0 0.0
    %828 = vmatpush1.msra.mxu0 0.0
    %829 = vmatprep.subr.mxu0 0.0
    %830 = vmatpush1.msra.mxu0 0.0
    %831 = vmatprep.subr.mxu0 0.0
    %832 = vmatpush1.msra.mxu0 0.0
    %833 = vmatprep.subr.mxu0 0.0
    %834 = vmatpush1.msra.mxu0 0.0
    %835 = vmatprep.subr.mxu0 0.0
    %836 = vmatpush1.msra.mxu0 0.0
    %837 = vmatprep.subr.mxu0 0.0
    %838 = vmatpush1.msra.mxu0 0.0
    %839 = vmatprep.subr.mxu0 0.0
    %840 = vmatpush1.msra.mxu0 0.0
    %841 = vmatprep.subr.mxu0 0.0
    %842 = vmatpush1.msra.mxu0 0.0
    %843 = vmatprep.subr.mxu0 0.0
    %844 = vmatpush1.msra.mxu0 0.0
    %845 = vmatprep.subr.mxu0 0.0
    %846 = vmatpush1.msra.mxu0 0.0
    %847 = vmatprep.mubr.f32.mxu0 0.0
    %848 = vmatmul.mubr.f32.gmra.mrb[0].mxu0 %v646
    %v849 = vpop.f32.mrb[0].mxu0
    %v850 = vadd.f32 0.0, %v849
    %v851 = vpop.f32.mrb[0].mxu0
    %v852 = vadd.f32 0.0, %v851
    %853 = vdwg.mxu0
    %854 = vmatprep.subr.mxu0 %v638
    %855 = vmatpush1.msra.mxu0 %v637
    %856 = vmatprep.subr.mxu0 %v642
    %857 = vmatpush1.msra.mxu0 %v641
    %858 = vmatprep.subr.mxu0 0.0
    %859 = vmatpush1.msra.mxu0 0.0
    %860 = vmatprep.subr.mxu0 0.0
    %861 = vmatpush1.msra.mxu0 0.0
    %862 = vmatprep.subr.mxu0 0.0
    %863 = vmatpush1.msra.mxu0 0.0
    %864 = vmatprep.subr.mxu0 0.0
    %865 = vmatpush1.msra.mxu0 0.0
    %866 = vmatprep.subr.mxu0 0.0
    %867 = vmatpush1.msra.mxu0 0.0
    %868 = vmatprep.subr.mxu0 0.0
    %869 = vmatpush1.msra.mxu0 0.0
    %870 = vmatprep.subr.mxu0 0.0
    %871 = vmatpush1.msra.mxu0 0.0
    %872 = vmatprep.subr.mxu0 0.0
    %873 = vmatpush1.msra.mxu0 0.0
    %874 = vmatprep.subr.mxu0 0.0
    %875 = vmatpush1.msra.mxu0 0.0
    %876 = vmatprep.subr.mxu0 0.0
    %877 = vmatpush1.msra.mxu0 0.0
    %878 = vmatprep.subr.mxu0 0.0
    %879 = vmatpush1.msra.mxu0 0.0
    %880 = vmatprep.subr.mxu0 0.0
    %881 = vmatpush1.msra.mxu0 0.0
    %882 = vmatprep.subr.mxu0 0.0
    %883 = vmatpush1.msra.mxu0 0.0
    %884 = vmatprep.subr.mxu0 0.0
    %885 = vmatpush1.msra.mxu0 0.0
    %886 = vmatprep.subr.mxu0 0.0
    %887 = vmatpush1.msra.mxu0 0.0
    %888 = vmatprep.subr.mxu0 0.0
    %889 = vmatpush1.msra.mxu0 0.0
    %890 = vmatprep.subr.mxu0 0.0
    %891 = vmatpush1.msra.mxu0 0.0
    %892 = vmatprep.subr.mxu0 0.0
    %893 = vmatpush1.msra.mxu0 0.0
    %894 = vmatprep.subr.mxu0 0.0
    %895 = vmatpush1.msra.mxu0 0.0
    %896 = vmatprep.subr.mxu0 0.0
    %897 = vmatpush1.msra.mxu0 0.0
    %898 = vmatprep.subr.mxu0 0.0
    %899 = vmatpush1.msra.mxu0 0.0
    %900 = vmatprep.subr.mxu0 0.0
    %901 = vmatpush1.msra.mxu0 0.0
    %902 = vmatprep.subr.mxu0 0.0
    %903 = vmatpush1.msra.mxu0 0.0
    %904 = vmatprep.subr.mxu0 0.0
    %905 = vmatpush1.msra.mxu0 0.0
    %906 = vmatprep.subr.mxu0 0.0
    %907 = vmatpush1.msra.mxu0 0.0
    %908 = vmatprep.subr.mxu0 0.0
    %909 = vmatpush1.msra.mxu0 0.0
    %910 = vmatprep.subr.mxu0 0.0
    %911 = vmatpush1.msra.mxu0 0.0
    %912 = vmatprep.subr.mxu0 0.0
    %913 = vmatpush1.msra.mxu0 0.0
    %914 = vmatprep.subr.mxu0 0.0
    %915 = vmatpush1.msra.mxu0 0.0
    %916 = vmatprep.subr.mxu0 0.0
    %917 = vmatpush1.msra.mxu0 0.0
    %918 = vmatprep.mubr.f32.mxu0 0.0
    %919 = vmatmul.mubr.f32.gmra.mrb[0].mxu0 %v361
    %v920 = vpop.f32.mrb[0].mxu0
    %v921 = vadd.f32 %v779, %v920
    %v922 = vpop.f32.mrb[0].mxu0
    %v923 = vadd.f32 %v781, %v922
    %924 = vdwg.mxu0
    %925 = vmatprep.subr.mxu0 %v640
    %926 = vmatpush1.msra.mxu0 %v639
    %927 = vmatprep.subr.mxu0 %v644
    %928 = vmatpush1.msra.mxu0 %v643
    %929 = vmatprep.subr.mxu0 0.0
    %930 = vmatpush1.msra.mxu0 0.0
    %931 = vmatprep.subr.mxu0 0.0
    %932 = vmatpush1.msra.mxu0 0.0
    %933 = vmatprep.subr.mxu0 0.0
    %934 = vmatpush1.msra.mxu0 0.0
    %935 = vmatprep.subr.mxu0 0.0
    %936 = vmatpush1.msra.mxu0 0.0
    %937 = vmatprep.subr.mxu0 0.0
    %938 = vmatpush1.msra.mxu0 0.0
    %939 = vmatprep.subr.mxu0 0.0
    %940 = vmatpush1.msra.mxu0 0.0
    %941 = vmatprep.subr.mxu0 0.0
    %942 = vmatpush1.msra.mxu0 0.0
    %943 = vmatprep.subr.mxu0 0.0
    %944 = vmatpush1.msra.mxu0 0.0
    %945 = vmatprep.subr.mxu0 0.0
    %946 = vmatpush1.msra.mxu0 0.0
    %947 = vmatprep.subr.mxu0 0.0
    %948 = vmatpush1.msra.mxu0 0.0
    %949 = vmatprep.subr.mxu0 0.0
    %950 = vmatpush1.msra.mxu0 0.0
    %951 = vmatprep.subr.mxu0 0.0
    %952 = vmatpush1.msra.mxu0 0.0
    %953 = vmatprep.subr.mxu0 0.0
    %954 = vmatpush1.msra.mxu0 0.0
    %955 = vmatprep.subr.mxu0 0.0
    %956 = vmatpush1.msra.mxu0 0.0
    %957 = vmatprep.subr.mxu0 0.0
    %958 = vmatpush1.msra.mxu0 0.0
    %959 = vmatprep.subr.mxu0 0.0
    %960 = vmatpush1.msra.mxu0 0.0
    %961 = vmatprep.subr.mxu0 0.0
    %962 = vmatpush1.msra.mxu0 0.0
    %963 = vmatprep.subr.mxu0 0.0
    %964 = vmatpush1.msra.mxu0 0.0
    %965 = vmatprep.subr.mxu0 0.0
    %966 = vmatpush1.msra.mxu0 0.0
    %967 = vmatprep.subr.mxu0 0.0
    %968 = vmatpush1.msra.mxu0 0.0
    %969 = vmatprep.subr.mxu0 0.0
    %970 = vmatpush1.msra.mxu0 0.0
    %971 = vmatprep.subr.mxu0 0.0
    %972 = vmatpush1.msra.mxu0 0.0
    %973 = vmatprep.subr.mxu0 0.0
    %974 = vmatpush1.msra.mxu0 0.0
    %975 = vmatprep.subr.mxu0 0.0
    %976 = vmatpush1.msra.mxu0 0.0
    %977 = vmatprep.subr.mxu0 0.0
    %978 = vmatpush1.msra.mxu0 0.0
    %979 = vmatprep.subr.mxu0 0.0
    %980 = vmatpush1.msra.mxu0 0.0
    %981 = vmatprep.subr.mxu0 0.0
    %982 = vmatpush1.msra.mxu0 0.0
    %983 = vmatprep.subr.mxu0 0.0
    %984 = vmatpush1.msra.mxu0 0.0
    %985 = vmatprep.subr.mxu0 0.0
    %986 = vmatpush1.msra.mxu0 0.0
    %987 = vmatprep.subr.mxu0 0.0
    %988 = vmatpush1.msra.mxu0 0.0
    %989 = vmatprep.mubr.f32.mxu0 0.0
    %990 = vmatmul.mubr.f32.gmra.mrb[0].mxu0 %v361
    %v991 = vpop.f32.mrb[0].mxu0
    %v992 = vadd.f32 %v850, %v991
    %v993 = vpop.f32.mrb[0].mxu0
    %v994 = vadd.f32 %v852, %v993
    %995 = vdwg.mxu0
    %s996 = scalar_lea.vmem [#allocation14], 4
    %v997 = vld [vmem:[%s996] sm:$0xf]
    %v999 = vlaneseq
    %v1000 = vshrl.u32 %v999, 7
    %v1001 = vsub.s32 0, %v1000
    %v1002 = vrot.slane %v997, %v1001
    %v1003 = vlaneseq
    %v1004 = vshrl.u32 %v1003, 7
    %v1005 = vsub.s32 1, %v1004
    %v1006 = vrot.slane %v997, %v1005
    %v1007 = vlaneseq
    %v1008 = vshrl.u32 %v1007, 7
    %v1009 = vsub.s32 2, %v1008
    %v1010 = vrot.slane %v997, %v1009
    %v1011 = vlaneseq
    %v1012 = vshrl.u32 %v1011, 7
    %v1013 = vsub.s32 3, %v1012
    %v1014 = vrot.slane %v997, %v1013
    %v1019 = vadd.f32 %v921, %v1002
    %v1020 = vadd.f32 %v923, %v1006
    %v1021 = vadd.f32 %v992, %v1010
    %v1022 = vadd.f32 %v994, %v1014
    %v1023 = vld [vmem:[#allocation13] sm:$0xff]
    %v1024 = vld [vmem:[#allocation13 + $0x8] sm:$0xff]
    %v1025 = vld [vmem:[#allocation13 + $0x10] sm:$0xff]
    %v1026 = vld [vmem:[#allocation13 + $0x18] sm:$0xff]
    %v1027 = vld [vmem:[#allocation13 + $0x20] sm:$0xff]
    %v1028 = vld [vmem:[#allocation13 + $0x28] sm:$0xff]
    %v1029 = vld [vmem:[#allocation13 + $0x30] sm:$0xff]
    %v1030 = vld [vmem:[#allocation13 + $0x38] sm:$0xff]
    %v1031 = vld [vmem:[#allocation13 + $0x40] sm:$0xff]
    %v1032 = vld [vmem:[#allocation13 + $0x48] sm:$0xff]
    %v1033 = vld [vmem:[#allocation13 + $0x50] sm:$0xff]
    %v1034 = vld [vmem:[#allocation13 + $0x58] sm:$0xff]
    %v1035 = vld [vmem:[#allocation13 + $0x60] sm:$0xff]
    %v1036 = vld [vmem:[#allocation13 + $0x68] sm:$0xff]
    %v1037 = vld [vmem:[#allocation13 + $0x70] sm:$0xff]
    %v1038 = vld [vmem:[#allocation13 + $0x78] sm:$0xff]
    %v1039 = vld [vmem:[#allocation13 + $0x80] sm:$0xff]
    %v1040 = vld [vmem:[#allocation13 + $0x88] sm:$0xff]
    %v1041 = vld [vmem:[#allocation13 + $0x90] sm:$0xff]
    %v1042 = vld [vmem:[#allocation13 + $0x98] sm:$0xff]
    %v1043 = vld [vmem:[#allocation13 + $0xa0] sm:$0xff]
    %v1044 = vld [vmem:[#allocation13 + $0xa8] sm:$0xff]
    %v1045 = vld [vmem:[#allocation13 + $0xb0] sm:$0xff]
    %v1046 = vld [vmem:[#allocation13 + $0xb8] sm:$0xff]
    %v1047 = vld [vmem:[#allocation13 + $0xc0] sm:$0xff]
    %v1048 = vld [vmem:[#allocation13 + $0xc8] sm:$0xff]
    %v1049 = vld [vmem:[#allocation13 + $0xd0] sm:$0xff]
    %v1050 = vld [vmem:[#allocation13 + $0xd8] sm:$0xff]
    %v1051 = vld [vmem:[#allocation13 + $0xe0] sm:$0xff]
    %v1052 = vld [vmem:[#allocation13 + $0xe8] sm:$0xff]
    %v1053 = vld [vmem:[#allocation13 + $0xf0] sm:$0xff]
    %v1054 = vld [vmem:[#allocation13 + $0xf8] sm:$0xff]
    %v1055 = vld [vmem:[#allocation13 + $0x100] sm:$0xff]
    %v1056 = vld [vmem:[#allocation13 + $0x108] sm:$0xff]
    %v1057 = vld [vmem:[#allocation13 + $0x110] sm:$0xff]
    %v1058 = vld [vmem:[#allocation13 + $0x118] sm:$0xff]
    %v1059 = vld [vmem:[#allocation13 + $0x120] sm:$0xff]
    %v1060 = vld [vmem:[#allocation13 + $0x128] sm:$0xff]
    %v1061 = vld [vmem:[#allocation13 + $0x130] sm:$0xff]
    %v1062 = vld [vmem:[#allocation13 + $0x138] sm:$0xff]
    %v1063 = vld [vmem:[#allocation13 + $0x140] sm:$0xff]
    %v1064 = vld [vmem:[#allocation13 + $0x148] sm:$0xff]
    %v1065 = vld [vmem:[#allocation13 + $0x150] sm:$0xff]
    %v1066 = vld [vmem:[#allocation13 + $0x158] sm:$0xff]
    %v1067 = vld [vmem:[#allocation13 + $0x160] sm:$0xff]
    %v1068 = vld [vmem:[#allocation13 + $0x168] sm:$0xff]
    %v1069 = vld [vmem:[#allocation13 + $0x170] sm:$0xff]
    %v1070 = vld [vmem:[#allocation13 + $0x178] sm:$0xff]
    %v1071 = vld [vmem:[#allocation13 + $0x180] sm:$0xff]
    %v1072 = vld [vmem:[#allocation13 + $0x188] sm:$0xff]
    %v1073 = vld [vmem:[#allocation13 + $0x190] sm:$0xff]
    %v1074 = vld [vmem:[#allocation13 + $0x198] sm:$0xff]
    %v1075 = vld [vmem:[#allocation13 + $0x1a0] sm:$0xff]
    %v1076 = vld [vmem:[#allocation13 + $0x1a8] sm:$0xff]
    %v1077 = vld [vmem:[#allocation13 + $0x1b0] sm:$0xff]
    %v1078 = vld [vmem:[#allocation13 + $0x1b8] sm:$0xff]
    %v1079 = vld [vmem:[#allocation13 + $0x1c0] sm:$0xff]
    %v1080 = vld [vmem:[#allocation13 + $0x1c8] sm:$0xff]
    %v1081 = vld [vmem:[#allocation13 + $0x1d0] sm:$0xff]
    %v1082 = vld [vmem:[#allocation13 + $0x1d8] sm:$0xff]
    %v1083 = vld [vmem:[#allocation13 + $0x1e0] sm:$0xff]
    %v1084 = vld [vmem:[#allocation13 + $0x1e8] sm:$0xff]
    %v1085 = vld [vmem:[#allocation13 + $0x1f0] sm:$0xff]
    %v1086 = vld [vmem:[#allocation13 + $0x1f8] sm:$0xff]
    %1087 = vmatprep.subr.mxu0 %v1024
    %1088 = vmatpush1.msra.mxu0 %v1023
    %1089 = vmatprep.subr.mxu0 %v1028
    %1090 = vmatpush1.msra.mxu0 %v1027
    %1091 = vmatprep.subr.mxu0 %v1032
    %1092 = vmatpush1.msra.mxu0 %v1031
    %1093 = vmatprep.subr.mxu0 %v1036
    %1094 = vmatpush1.msra.mxu0 %v1035
    %1095 = vmatprep.subr.mxu0 %v1040
    %1096 = vmatpush1.msra.mxu0 %v1039
    %1097 = vmatprep.subr.mxu0 %v1044
    %1098 = vmatpush1.msra.mxu0 %v1043
    %1099 = vmatprep.subr.mxu0 %v1048
    %1100 = vmatpush1.msra.mxu0 %v1047
    %1101 = vmatprep.subr.mxu0 %v1052
    %1102 = vmatpush1.msra.mxu0 %v1051
    %1103 = vmatprep.subr.mxu0 %v1056
    %1104 = vmatpush1.msra.mxu0 %v1055
    %1105 = vmatprep.subr.mxu0 %v1060
    %1106 = vmatpush1.msra.mxu0 %v1059
    %1107 = vmatprep.subr.mxu0 %v1064
    %1108 = vmatpush1.msra.mxu0 %v1063
    %1109 = vmatprep.subr.mxu0 %v1068
    %1110 = vmatpush1.msra.mxu0 %v1067
    %1111 = vmatprep.subr.mxu0 %v1072
    %1112 = vmatpush1.msra.mxu0 %v1071
    %1113 = vmatprep.subr.mxu0 %v1076
    %1114 = vmatpush1.msra.mxu0 %v1075
    %1115 = vmatprep.subr.mxu0 %v1080
    %1116 = vmatpush1.msra.mxu0 %v1079
    %1117 = vmatprep.subr.mxu0 %v1084
    %1118 = vmatpush1.msra.mxu0 %v1083
    %1119 = vmatprep.subr.mxu0 0.0
    %1120 = vmatpush1.msra.mxu0 0.0
    %1121 = vmatprep.subr.mxu0 0.0
    %1122 = vmatpush1.msra.mxu0 0.0
    %1123 = vmatprep.subr.mxu0 0.0
    %1124 = vmatpush1.msra.mxu0 0.0
    %1125 = vmatprep.subr.mxu0 0.0
    %1126 = vmatpush1.msra.mxu0 0.0
    %1127 = vmatprep.subr.mxu0 0.0
    %1128 = vmatpush1.msra.mxu0 0.0
    %1129 = vmatprep.subr.mxu0 0.0
    %1130 = vmatpush1.msra.mxu0 0.0
    %1131 = vmatprep.subr.mxu0 0.0
    %1132 = vmatpush1.msra.mxu0 0.0
    %1133 = vmatprep.subr.mxu0 0.0
    %1134 = vmatpush1.msra.mxu0 0.0
    %1135 = vmatprep.subr.mxu0 0.0
    %1136 = vmatpush1.msra.mxu0 0.0
    %1137 = vmatprep.subr.mxu0 0.0
    %1138 = vmatpush1.msra.mxu0 0.0
    %1139 = vmatprep.subr.mxu0 0.0
    %1140 = vmatpush1.msra.mxu0 0.0
    %1141 = vmatprep.subr.mxu0 0.0
    %1142 = vmatpush1.msra.mxu0 0.0
    %1143 = vmatprep.subr.mxu0 0.0
    %1144 = vmatpush1.msra.mxu0 0.0
    %1145 = vmatprep.subr.mxu0 0.0
    %1146 = vmatpush1.msra.mxu0 0.0
    %1147 = vmatprep.subr.mxu0 0.0
    %1148 = vmatpush1.msra.mxu0 0.0
    %1149 = vmatprep.subr.mxu0 0.0
    %1150 = vmatpush1.msra.mxu0 0.0
    %1151 = vmatprep.mubr.f32.mxu0 0.0
    %1152 = vmatmul.mubr.f32.gmra.mrb[0].mxu0 %v632
    %v1153 = vpop.f32.mrb[0].mxu0
    %v1154 = vadd.f32 0.0, %v1153
    %v1155 = vpop.f32.mrb[0].mxu0
    %v1156 = vadd.f32 0.0, %v1155
    %1157 = vdwg.mxu0
    %1158 = vmatprep.subr.mxu0 %v1026
    %1159 = vmatpush1.msra.mxu0 %v1025
    %1160 = vmatprep.subr.mxu0 %v1030
    %1161 = vmatpush1.msra.mxu0 %v1029
    %1162 = vmatprep.subr.mxu0 %v1034
    %1163 = vmatpush1.msra.mxu0 %v1033
    %1164 = vmatprep.subr.mxu0 %v1038
    %1165 = vmatpush1.msra.mxu0 %v1037
    %1166 = vmatprep.subr.mxu0 %v1042
    %1167 = vmatpush1.msra.mxu0 %v1041
    %1168 = vmatprep.subr.mxu0 %v1046
    %1169 = vmatpush1.msra.mxu0 %v1045
    %1170 = vmatprep.subr.mxu0 %v1050
    %1171 = vmatpush1.msra.mxu0 %v1049
    %1172 = vmatprep.subr.mxu0 %v1054
    %1173 = vmatpush1.msra.mxu0 %v1053
    %1174 = vmatprep.subr.mxu0 %v1058
    %1175 = vmatpush1.msra.mxu0 %v1057
    %1176 = vmatprep.subr.mxu0 %v1062
    %1177 = vmatpush1.msra.mxu0 %v1061
    %1178 = vmatprep.subr.mxu0 %v1066
    %1179 = vmatpush1.msra.mxu0 %v1065
    %1180 = vmatprep.subr.mxu0 %v1070
    %1181 = vmatpush1.msra.mxu0 %v1069
    %1182 = vmatprep.subr.mxu0 %v1074
    %1183 = vmatpush1.msra.mxu0 %v1073
    %1184 = vmatprep.subr.mxu0 %v1078
    %1185 = vmatpush1.msra.mxu0 %v1077
    %1186 = vmatprep.subr.mxu0 %v1082
    %1187 = vmatpush1.msra.mxu0 %v1081
    %1188 = vmatprep.subr.mxu0 %v1086
    %1189 = vmatpush1.msra.mxu0 %v1085
    %1190 = vmatprep.subr.mxu0 0.0
    %1191 = vmatpush1.msra.mxu0 0.0
    %1192 = vmatprep.subr.mxu0 0.0
    %1193 = vmatpush1.msra.mxu0 0.0
    %1194 = vmatprep.subr.mxu0 0.0
    %1195 = vmatpush1.msra.mxu0 0.0
    %1196 = vmatprep.subr.mxu0 0.0
    %1197 = vmatpush1.msra.mxu0 0.0
    %1198 = vmatprep.subr.mxu0 0.0
    %1199 = vmatpush1.msra.mxu0 0.0
    %1200 = vmatprep.subr.mxu0 0.0
    %1201 = vmatpush1.msra.mxu0 0.0
    %1202 = vmatprep.subr.mxu0 0.0
    %1203 = vmatpush1.msra.mxu0 0.0
    %1204 = vmatprep.subr.mxu0 0.0
    %1205 = vmatpush1.msra.mxu0 0.0
    %1206 = vmatprep.subr.mxu0 0.0
    %1207 = vmatpush1.msra.mxu0 0.0
    %1208 = vmatprep.subr.mxu0 0.0
    %1209 = vmatpush1.msra.mxu0 0.0
    %1210 = vmatprep.subr.mxu0 0.0
    %1211 = vmatpush1.msra.mxu0 0.0
    %1212 = vmatprep.subr.mxu0 0.0
    %1213 = vmatpush1.msra.mxu0 0.0
    %1214 = vmatprep.subr.mxu0 0.0
    %1215 = vmatpush1.msra.mxu0 0.0
    %1216 = vmatprep.subr.mxu0 0.0
    %1217 = vmatpush1.msra.mxu0 0.0
    %1218 = vmatprep.subr.mxu0 0.0
    %1219 = vmatpush1.msra.mxu0 0.0
    %1220 = vmatprep.subr.mxu0 0.0
    %1221 = vmatpush1.msra.mxu0 0.0
    %1222 = vmatprep.mubr.f32.mxu0 0.0
    %1223 = vmatmul.mubr.f32.gmra.mrb[0].mxu0 %v632
    %v1224 = vpop.f32.mrb[0].mxu0
    %v1225 = vadd.f32 0.0, %v1224
    %v1226 = vpop.f32.mrb[0].mxu0
    %v1227 = vadd.f32 0.0, %v1226
    %1228 = vdwg.mxu0
    %v1229 = vadd.f32 %v1019, %v1154
    %v1230 = vadd.f32 %v1020, %v1156
    %v1231 = vadd.f32 %v1021, %v1225
    %v1232 = vadd.f32 %v1022, %v1227
    %s1233 = scalar_lea.vmem %s8, 8
    %v1234 = vld [vmem:[%s1233] sm:$0xff]
    %1235 = vmatprep.subr.mxu0 0.0
    %1236 = vmatpush1.msra.mxu0 %v1234
    %1237 = vmatprep.subr.mxu0 0.0
    %1238 = vmatpush1.msra.mxu0 0.0
    %1239 = vmatprep.subr.mxu0 0.0
    %1240 = vmatpush1.msra.mxu0 0.0
    %1241 = vmatprep.subr.mxu0 0.0
    %1242 = vmatpush1.msra.mxu0 0.0
    %1243 = vmatprep.subr.mxu0 0.0
    %1244 = vmatpush1.msra.mxu0 0.0
    %1245 = vmatprep.subr.mxu0 0.0
    %1246 = vmatpush1.msra.mxu0 0.0
    %1247 = vmatprep.subr.mxu0 0.0
    %1248 = vmatpush1.msra.mxu0 0.0
    %1249 = vmatprep.subr.mxu0 0.0
    %1250 = vmatpush1.msra.mxu0 0.0
    %1251 = vmatprep.subr.mxu0 0.0
    %1252 = vmatpush1.msra.mxu0 0.0
    %1253 = vmatprep.subr.mxu0 0.0
    %1254 = vmatpush1.msra.mxu0 0.0
    %1255 = vmatprep.subr.mxu0 0.0
    %1256 = vmatpush1.msra.mxu0 0.0
    %1257 = vmatprep.subr.mxu0 0.0
    %1258 = vmatpush1.msra.mxu0 0.0
    %1259 = vmatprep.subr.mxu0 0.0
    %1260 = vmatpush1.msra.mxu0 0.0
    %1261 = vmatprep.subr.mxu0 0.0
    %1262 = vmatpush1.msra.mxu0 0.0
    %1263 = vmatprep.subr.mxu0 0.0
    %1264 = vmatpush1.msra.mxu0 0.0
    %1265 = vmatprep.subr.mxu0 0.0
    %1266 = vmatpush1.msra.mxu0 0.0
    %1267 = vmatprep.subr.mxu0 0.0
    %1268 = vmatpush1.msra.mxu0 0.0
    %1269 = vmatprep.subr.mxu0 0.0
    %1270 = vmatpush1.msra.mxu0 0.0
    %1271 = vmatprep.subr.mxu0 0.0
    %1272 = vmatpush1.msra.mxu0 0.0
    %1273 = vmatprep.subr.mxu0 0.0
    %1274 = vmatpush1.msra.mxu0 0.0
    %1275 = vmatprep.subr.mxu0 0.0
    %1276 = vmatpush1.msra.mxu0 0.0
    %1277 = vmatprep.subr.mxu0 0.0
    %1278 = vmatpush1.msra.mxu0 0.0
    %1279 = vmatprep.subr.mxu0 0.0
    %1280 = vmatpush1.msra.mxu0 0.0
    %1281 = vmatprep.subr.mxu0 0.0
    %1282 = vmatpush1.msra.mxu0 0.0
    %1283 = vmatprep.subr.mxu0 0.0
    %1284 = vmatpush1.msra.mxu0 0.0
    %1285 = vmatprep.subr.mxu0 0.0
    %1286 = vmatpush1.msra.mxu0 0.0
    %1287 = vmatprep.subr.mxu0 0.0
    %1288 = vmatpush1.msra.mxu0 0.0
    %1289 = vmatprep.subr.mxu0 0.0
    %1290 = vmatpush1.msra.mxu0 0.0
    %1291 = vmatprep.subr.mxu0 0.0
    %1292 = vmatpush1.msra.mxu0 0.0
    %1293 = vmatprep.subr.mxu0 0.0
    %1294 = vmatpush1.msra.mxu0 0.0
    %1295 = vmatprep.subr.mxu0 0.0
    %1296 = vmatpush1.msra.mxu0 0.0
    %1297 = vmatprep.subr.mxu0 0.0
    %1298 = vmatpush1.msra.mxu0 0.0
    %1299 = vmatprep.mubr.f32.mxu0 0.0
    %1300 = vmatmul.mubr.f32.gmra.mrb[0].mxu0 %v534
    %v1301 = vpop.f32.mrb[0].mxu0
    %v1302 = vadd.f32 0.0, %v1301
    %v1303 = vpop.f32.mrb[0].mxu0
    %1304 = vdwg.mxu0
    %v1305 = vtanh.pop %v1302
    %s1306 = scalar_lea.vmem [#allocation8], 8
    %v1307 = vld [vmem:[%s1306] sm:$0xff]
    %v1308 = vxor.u32 %v1229, 2147483648
    %v1309 = vmul.f32 %v1308, 1.442695
    %v1310 = vpow.pop %v1309
    %v1311 = vadd.f32 %v1310, 1.0
    %v1312 = vrcp.pop %v1311
    %v1313 = vmul.f32 1.0, %v1312
    %v1314 = vxor.u32 %v1230, 2147483648
    %v1315 = vmul.f32 %v1314, 1.442695
    %v1316 = vpow.pop %v1315
    %v1317 = vadd.f32 %v1316, 1.0
    %v1318 = vrcp.pop %v1317
    %v1319 = vmul.f32 1.0, %v1318
    %v1320 = vtanh.pop %v1231
    %v1321 = vxor.u32 %v1232, 2147483648
    %v1322 = vmul.f32 %v1321, 1.442695
    %v1323 = vpow.pop %v1322
    %v1324 = vadd.f32 %v1323, 1.0
    %v1325 = vrcp.pop %v1324
    %v1326 = vmul.f32 1.0, %v1325
    %v1327 = vmul.f32 %v1319, %v1307
    %v1328 = vmul.f32 %v1313, %v1320
    %v1329 = vadd.f32 %v1327, %v1328
    %v1330 = vadd.f32 %v1329, %v1305
    %v1331 = vtanh.pop %v1330
    %v1332 = vmul.f32 %v1326, %v1331
    %s1333 = scalar_lea.vmem [#allocation16], 8
    %1334 = vst [vmem:[%s1333] sm:$0xff] %v1332
    %s1335 = scalar_lea.vmem [#allocation17], 8
    %1336 = vst [vmem:[%s1335] sm:$0xff] %v1330
    %1337 = vst [vmem:[#allocation19 + $0x8] sm:$0xff] %v1332
    %s1338 = scalar_lea.vmem [#allocation10], 128
    %v1339 = vld [vmem:[%s1338] sm:$0xff]
    %v1340 = vld [vmem:[%s1338 + $0x8] sm:$0xff]
    %v1341 = vld [vmem:[%s1338 + $0x10] sm:$0xff]
    %v1342 = vld [vmem:[%s1338 + $0x18] sm:$0xff]
    %v1343 = vld [vmem:[%s1338 + $0x20] sm:$0xff]
    %v1344 = vld [vmem:[%s1338 + $0x28] sm:$0xff]
    %v1345 = vld [vmem:[%s1338 + $0x30] sm:$0xff]
    %v1346 = vld [vmem:[%s1338 + $0x38] sm:$0xff]
    %s1347 = scalar_lea.vmem [#allocation7], 16
    %v1348 = vld [vmem:[%s1347] sm:$0xff]
    %s1349 = scalar_lea.vmem [#allocation11], 1024
    %v1350 = vld [vmem:[%s1349] sm:$0xff]
    %v1351 = vld [vmem:[%s1349 + $0x8] sm:$0xff]
    %v1352 = vld [vmem:[%s1349 + $0x10] sm:$0xff]
    %v1353 = vld [vmem:[%s1349 + $0x18] sm:$0xff]
    %v1354 = vld [vmem:[%s1349 + $0x20] sm:$0xff]
    %v1355 = vld [vmem:[%s1349 + $0x28] sm:$0xff]
    %v1356 = vld [vmem:[%s1349 + $0x30] sm:$0xff]
    %v1357 = vld [vmem:[%s1349 + $0x38] sm:$0xff]
    %v1358 = vld [vmem:[%s1349 + $0x40] sm:$0xff]
    %v1359 = vld [vmem:[%s1349 + $0x48] sm:$0xff]
    %v1360 = vld [vmem:[%s1349 + $0x50] sm:$0xff]
    %v1361 = vld [vmem:[%s1349 + $0x58] sm:$0xff]
    %v1362 = vld [vmem:[%s1349 + $0x60] sm:$0xff]
    %v1363 = vld [vmem:[%s1349 + $0x68] sm:$0xff]
    %v1364 = vld [vmem:[%s1349 + $0x70] sm:$0xff]
    %v1365 = vld [vmem:[%s1349 + $0x78] sm:$0xff]
    %v1366 = vld [vmem:[%s1349 + $0x80] sm:$0xff]
    %v1367 = vld [vmem:[%s1349 + $0x88] sm:$0xff]
    %v1368 = vld [vmem:[%s1349 + $0x90] sm:$0xff]
    %v1369 = vld [vmem:[%s1349 + $0x98] sm:$0xff]
    %v1370 = vld [vmem:[%s1349 + $0xa0] sm:$0xff]
    %v1371 = vld [vmem:[%s1349 + $0xa8] sm:$0xff]
    %v1372 = vld [vmem:[%s1349 + $0xb0] sm:$0xff]
    %v1373 = vld [vmem:[%s1349 + $0xb8] sm:$0xff]
    %v1374 = vld [vmem:[%s1349 + $0xc0] sm:$0xff]
    %v1375 = vld [vmem:[%s1349 + $0xc8] sm:$0xff]
    %v1376 = vld [vmem:[%s1349 + $0xd0] sm:$0xff]
    %v1377 = vld [vmem:[%s1349 + $0xd8] sm:$0xff]
    %v1378 = vld [vmem:[%s1349 + $0xe0] sm:$0xff]
    %v1379 = vld [vmem:[%s1349 + $0xe8] sm:$0xff]
    %v1380 = vld [vmem:[%s1349 + $0xf0] sm:$0xff]
    %v1381 = vld [vmem:[%s1349 + $0xf8] sm:$0xff]
    %v1382 = vld [vmem:[%s1349 + $0x100] sm:$0xff]
    %v1383 = vld [vmem:[%s1349 + $0x108] sm:$0xff]
    %v1384 = vld [vmem:[%s1349 + $0x110] sm:$0xff]
    %v1385 = vld [vmem:[%s1349 + $0x118] sm:$0xff]
    %v1386 = vld [vmem:[%s1349 + $0x120] sm:$0xff]
    %v1387 = vld [vmem:[%s1349 + $0x128] sm:$0xff]
    %v1388 = vld [vmem:[%s1349 + $0x130] sm:$0xff]
    %v1389 = vld [vmem:[%s1349 + $0x138] sm:$0xff]
    %v1390 = vld [vmem:[%s1349 + $0x140] sm:$0xff]
    %v1391 = vld [vmem:[%s1349 + $0x148] sm:$0xff]
    %v1392 = vld [vmem:[%s1349 + $0x150] sm:$0xff]
    %v1393 = vld [vmem:[%s1349 + $0x158] sm:$0xff]
    %v1394 = vld [vmem:[%s1349 + $0x160] sm:$0xff]
    %v1395 = vld [vmem:[%s1349 + $0x168] sm:$0xff]
    %v1396 = vld [vmem:[%s1349 + $0x170] sm:$0xff]
    %v1397 = vld [vmem:[%s1349 + $0x178] sm:$0xff]
    %v1398 = vld [vmem:[%s1349 + $0x180] sm:$0xff]
    %v1399 = vld [vmem:[%s1349 + $0x188] sm:$0xff]
    %v1400 = vld [vmem:[%s1349 + $0x190] sm:$0xff]
    %v1401 = vld [vmem:[%s1349 + $0x198] sm:$0xff]
    %v1402 = vld [vmem:[%s1349 + $0x1a0] sm:$0xff]
    %v1403 = vld [vmem:[%s1349 + $0x1a8] sm:$0xff]
    %v1404 = vld [vmem:[%s1349 + $0x1b0] sm:$0xff]
    %v1405 = vld [vmem:[%s1349 + $0x1b8] sm:$0xff]
    %v1406 = vld [vmem:[%s1349 + $0x1c0] sm:$0xff]
    %v1407 = vld [vmem:[%s1349 + $0x1c8] sm:$0xff]
    %v1408 = vld [vmem:[%s1349 + $0x1d0] sm:$0xff]
    %v1409 = vld [vmem:[%s1349 + $0x1d8] sm:$0xff]
    %v1410 = vld [vmem:[%s1349 + $0x1e0] sm:$0xff]
    %v1411 = vld [vmem:[%s1349 + $0x1e8] sm:$0xff]
    %v1412 = vld [vmem:[%s1349 + $0x1f0] sm:$0xff]
    %v1413 = vld [vmem:[%s1349 + $0x1f8] sm:$0xff]
    %1414 = vmatprep.subr.mxu0 %v1351
    %1415 = vmatpush1.msra.mxu0 %v1350
    %1416 = vmatprep.subr.mxu0 %v1355
    %1417 = vmatpush1.msra.mxu0 %v1354
    %1418 = vmatprep.subr.mxu0 %v1359
    %1419 = vmatpush1.msra.mxu0 %v1358
    %1420 = vmatprep.subr.mxu0 %v1363
    %1421 = vmatpush1.msra.mxu0 %v1362
    %1422 = vmatprep.subr.mxu0 %v1367
    %1423 = vmatpush1.msra.mxu0 %v1366
    %1424 = vmatprep.subr.mxu0 %v1371
    %1425 = vmatpush1.msra.mxu0 %v1370
    %1426 = vmatprep.subr.mxu0 %v1375
    %1427 = vmatpush1.msra.mxu0 %v1374
    %1428 = vmatprep.subr.mxu0 %v1379
    %1429 = vmatpush1.msra.mxu0 %v1378
    %1430 = vmatprep.subr.mxu0 %v1383
    %1431 = vmatpush1.msra.mxu0 %v1382
    %1432 = vmatprep.subr.mxu0 %v1387
    %1433 = vmatpush1.msra.mxu0 %v1386
    %1434 = vmatprep.subr.mxu0 %v1391
    %1435 = vmatpush1.msra.mxu0 %v1390
    %1436 = vmatprep.subr.mxu0 %v1395
    %1437 = vmatpush1.msra.mxu0 %v1394
    %1438 = vmatprep.subr.mxu0 %v1399
    %1439 = vmatpush1.msra.mxu0 %v1398
    %1440 = vmatprep.subr.mxu0 %v1403
    %1441 = vmatpush1.msra.mxu0 %v1402
    %1442 = vmatprep.subr.mxu0 %v1407
    %1443 = vmatpush1.msra.mxu0 %v1406
    %1444 = vmatprep.subr.mxu0 %v1411
    %1445 = vmatpush1.msra.mxu0 %v1410
    %1446 = vmatprep.subr.mxu0 0.0
    %1447 = vmatpush1.msra.mxu0 0.0
    %1448 = vmatprep.subr.mxu0 0.0
    %1449 = vmatpush1.msra.mxu0 0.0
    %1450 = vmatprep.subr.mxu0 0.0
    %1451 = vmatpush1.msra.mxu0 0.0
    %1452 = vmatprep.subr.mxu0 0.0
    %1453 = vmatpush1.msra.mxu0 0.0
    %1454 = vmatprep.subr.mxu0 0.0
    %1455 = vmatpush1.msra.mxu0 0.0
    %1456 = vmatprep.subr.mxu0 0.0
    %1457 = vmatpush1.msra.mxu0 0.0
    %1458 = vmatprep.subr.mxu0 0.0
    %1459 = vmatpush1.msra.mxu0 0.0
    %1460 = vmatprep.subr.mxu0 0.0
    %1461 = vmatpush1.msra.mxu0 0.0
    %1462 = vmatprep.subr.mxu0 0.0
    %1463 = vmatpush1.msra.mxu0 0.0
    %1464 = vmatprep.subr.mxu0 0.0
    %1465 = vmatpush1.msra.mxu0 0.0
    %1466 = vmatprep.subr.mxu0 0.0
    %1467 = vmatpush1.msra.mxu0 0.0
    %1468 = vmatprep.subr.mxu0 0.0
    %1469 = vmatpush1.msra.mxu0 0.0
    %1470 = vmatprep.subr.mxu0 0.0
    %1471 = vmatpush1.msra.mxu0 0.0
    %1472 = vmatprep.subr.mxu0 0.0
    %1473 = vmatpush1.msra.mxu0 0.0
    %1474 = vmatprep.subr.mxu0 0.0
    %1475 = vmatpush1.msra.mxu0 0.0
    %1476 = vmatprep.subr.mxu0 0.0
    %1477 = vmatpush1.msra.mxu0 0.0
    %1478 = vmatprep.mubr.f32.mxu0 0.0
    %1479 = vmatmul.mubr.f32.gmra.mrb[0].mxu0 %v1348
    %v1480 = vpop.f32.mrb[0].mxu0
    %v1481 = vadd.f32 0.0, %v1480
    %v1482 = vpop.f32.mrb[0].mxu0
    %v1483 = vadd.f32 0.0, %v1482
    %1484 = vdwg.mxu0
    %1485 = vmatprep.subr.mxu0 %v1353
    %1486 = vmatpush1.msra.mxu0 %v1352
    %1487 = vmatprep.subr.mxu0 %v1357
    %1488 = vmatpush1.msra.mxu0 %v1356
    %1489 = vmatprep.subr.mxu0 %v1361
    %1490 = vmatpush1.msra.mxu0 %v1360
    %1491 = vmatprep.subr.mxu0 %v1365
    %1492 = vmatpush1.msra.mxu0 %v1364
    %1493 = vmatprep.subr.mxu0 %v1369
    %1494 = vmatpush1.msra.mxu0 %v1368
    %1495 = vmatprep.subr.mxu0 %v1373
    %1496 = vmatpush1.msra.mxu0 %v1372
    %1497 = vmatprep.subr.mxu0 %v1377
    %1498 = vmatpush1.msra.mxu0 %v1376
    %1499 = vmatprep.subr.mxu0 %v1381
    %1500 = vmatpush1.msra.mxu0 %v1380
    %1501 = vmatprep.subr.mxu0 %v1385
    %1502 = vmatpush1.msra.mxu0 %v1384
    %1503 = vmatprep.subr.mxu0 %v1389
    %1504 = vmatpush1.msra.mxu0 %v1388
    %1505 = vmatprep.subr.mxu0 %v1393
    %1506 = vmatpush1.msra.mxu0 %v1392
    %1507 = vmatprep.subr.mxu0 %v1397
    %1508 = vmatpush1.msra.mxu0 %v1396
    %1509 = vmatprep.subr.mxu0 %v1401
    %1510 = vmatpush1.msra.mxu0 %v1400
    %1511 = vmatprep.subr.mxu0 %v1405
    %1512 = vmatpush1.msra.mxu0 %v1404
    %1513 = vmatprep.subr.mxu0 %v1409
    %1514 = vmatpush1.msra.mxu0 %v1408
    %1515 = vmatprep.subr.mxu0 %v1413
    %1516 = vmatpush1.msra.mxu0 %v1412
    %1517 = vmatprep.subr.mxu0 0.0
    %1518 = vmatpush1.msra.mxu0 0.0
    %1519 = vmatprep.subr.mxu0 0.0
    %1520 = vmatpush1.msra.mxu0 0.0
    %1521 = vmatprep.subr.mxu0 0.0
    %1522 = vmatpush1.msra.mxu0 0.0
    %1523 = vmatprep.subr.mxu0 0.0
    %1524 = vmatpush1.msra.mxu0 0.0
    %1525 = vmatprep.subr.mxu0 0.0
    %1526 = vmatpush1.msra.mxu0 0.0
    %1527 = vmatprep.subr.mxu0 0.0
    %1528 = vmatpush1.msra.mxu0 0.0
    %1529 = vmatprep.subr.mxu0 0.0
    %1530 = vmatpush1.msra.mxu0 0.0
    %1531 = vmatprep.subr.mxu0 0.0
    %1532 = vmatpush1.msra.mxu0 0.0
    %1533 = vmatprep.subr.mxu0 0.0
    %1534 = vmatpush1.msra.mxu0 0.0
    %1535 = vmatprep.subr.mxu0 0.0
    %1536 = vmatpush1.msra.mxu0 0.0
    %1537 = vmatprep.subr.mxu0 0.0
    %1538 = vmatpush1.msra.mxu0 0.0
    %1539 = vmatprep.subr.mxu0 0.0
    %1540 = vmatpush1.msra.mxu0 0.0
    %1541 = vmatprep.subr.mxu0 0.0
    %1542 = vmatpush1.msra.mxu0 0.0
    %1543 = vmatprep.subr.mxu0 0.0
    %1544 = vmatpush1.msra.mxu0 0.0
    %1545 = vmatprep.subr.mxu0 0.0
    %1546 = vmatpush1.msra.mxu0 0.0
    %1547 = vmatprep.subr.mxu0 0.0
    %1548 = vmatpush1.msra.mxu0 0.0
    %1549 = vmatprep.mubr.f32.mxu0 0.0
    %1550 = vmatmul.mubr.f32.gmra.mrb[0].mxu0 %v1348
    %v1551 = vpop.f32.mrb[0].mxu0
    %v1552 = vadd.f32 0.0, %v1551
    %v1553 = vpop.f32.mrb[0].mxu0
    %v1554 = vadd.f32 0.0, %v1553
    %1555 = vdwg.mxu0
    %1556 = vmatprep.subr.mxu0 %v1340
    %1557 = vmatpush1.msra.mxu0 %v1339
    %1558 = vmatprep.subr.mxu0 %v1344
    %1559 = vmatpush1.msra.mxu0 %v1343
    %1560 = vmatprep.subr.mxu0 0.0
    %1561 = vmatpush1.msra.mxu0 0.0
    %1562 = vmatprep.subr.mxu0 0.0
    %1563 = vmatpush1.msra.mxu0 0.0
    %1564 = vmatprep.subr.mxu0 0.0
    %1565 = vmatpush1.msra.mxu0 0.0
    %1566 = vmatprep.subr.mxu0 0.0
    %1567 = vmatpush1.msra.mxu0 0.0
    %1568 = vmatprep.subr.mxu0 0.0
    %1569 = vmatpush1.msra.mxu0 0.0
    %1570 = vmatprep.subr.mxu0 0.0
    %1571 = vmatpush1.msra.mxu0 0.0
    %1572 = vmatprep.subr.mxu0 0.0
    %1573 = vmatpush1.msra.mxu0 0.0
    %1574 = vmatprep.subr.mxu0 0.0
    %1575 = vmatpush1.msra.mxu0 0.0
    %1576 = vmatprep.subr.mxu0 0.0
    %1577 = vmatpush1.msra.mxu0 0.0
    %1578 = vmatprep.subr.mxu0 0.0
    %1579 = vmatpush1.msra.mxu0 0.0
    %1580 = vmatprep.subr.mxu0 0.0
    %1581 = vmatpush1.msra.mxu0 0.0
    %1582 = vmatprep.subr.mxu0 0.0
    %1583 = vmatpush1.msra.mxu0 0.0
    %1584 = vmatprep.subr.mxu0 0.0
    %1585 = vmatpush1.msra.mxu0 0.0
    %1586 = vmatprep.subr.mxu0 0.0
    %1587 = vmatpush1.msra.mxu0 0.0
    %1588 = vmatprep.subr.mxu0 0.0
    %1589 = vmatpush1.msra.mxu0 0.0
    %1590 = vmatprep.subr.mxu0 0.0
    %1591 = vmatpush1.msra.mxu0 0.0
    %1592 = vmatprep.subr.mxu0 0.0
    %1593 = vmatpush1.msra.mxu0 0.0
    %1594 = vmatprep.subr.mxu0 0.0
    %1595 = vmatpush1.msra.mxu0 0.0
    %1596 = vmatprep.subr.mxu0 0.0
    %1597 = vmatpush1.msra.mxu0 0.0
    %1598 = vmatprep.subr.mxu0 0.0
    %1599 = vmatpush1.msra.mxu0 0.0
    %1600 = vmatprep.subr.mxu0 0.0
    %1601 = vmatpush1.msra.mxu0 0.0
    %1602 = vmatprep.subr.mxu0 0.0
    %1603 = vmatpush1.msra.mxu0 0.0
    %1604 = vmatprep.subr.mxu0 0.0
    %1605 = vmatpush1.msra.mxu0 0.0
    %1606 = vmatprep.subr.mxu0 0.0
    %1607 = vmatpush1.msra.mxu0 0.0
    %1608 = vmatprep.subr.mxu0 0.0
    %1609 = vmatpush1.msra.mxu0 0.0
    %1610 = vmatprep.subr.mxu0 0.0
    %1611 = vmatpush1.msra.mxu0 0.0
    %1612 = vmatprep.subr.mxu0 0.0
    %1613 = vmatpush1.msra.mxu0 0.0
    %1614 = vmatprep.subr.mxu0 0.0
    %1615 = vmatpush1.msra.mxu0 0.0
    %1616 = vmatprep.subr.mxu0 0.0
    %1617 = vmatpush1.msra.mxu0 0.0
    %1618 = vmatprep.subr.mxu0 0.0
    %1619 = vmatpush1.msra.mxu0 0.0
    %1620 = vmatprep.mubr.f32.mxu0 0.0
    %1621 = vmatmul.mubr.f32.gmra.mrb[0].mxu0 %v361
    %v1622 = vpop.f32.mrb[0].mxu0
    %v1623 = vadd.f32 %v1481, %v1622
    %v1624 = vpop.f32.mrb[0].mxu0
    %v1625 = vadd.f32 %v1483, %v1624
    %1626 = vdwg.mxu0
    %1627 = vmatprep.subr.mxu0 %v1342
    %1628 = vmatpush1.msra.mxu0 %v1341
    %1629 = vmatprep.subr.mxu0 %v1346
    %1630 = vmatpush1.msra.mxu0 %v1345
    %1631 = vmatprep.subr.mxu0 0.0
    %1632 = vmatpush1.msra.mxu0 0.0
    %1633 = vmatprep.subr.mxu0 0.0
    %1634 = vmatpush1.msra.mxu0 0.0
    %1635 = vmatprep.subr.mxu0 0.0
    %1636 = vmatpush1.msra.mxu0 0.0
    %1637 = vmatprep.subr.mxu0 0.0
    %1638 = vmatpush1.msra.mxu0 0.0
    %1639 = vmatprep.subr.mxu0 0.0
    %1640 = vmatpush1.msra.mxu0 0.0
    %1641 = vmatprep.subr.mxu0 0.0
    %1642 = vmatpush1.msra.mxu0 0.0
    %1643 = vmatprep.subr.mxu0 0.0
    %1644 = vmatpush1.msra.mxu0 0.0
    %1645 = vmatprep.subr.mxu0 0.0
    %1646 = vmatpush1.msra.mxu0 0.0
    %1647 = vmatprep.subr.mxu0 0.0
    %1648 = vmatpush1.msra.mxu0 0.0
    %1649 = vmatprep.subr.mxu0 0.0
    %1650 = vmatpush1.msra.mxu0 0.0
    %1651 = vmatprep.subr.mxu0 0.0
    %1652 = vmatpush1.msra.mxu0 0.0
    %1653 = vmatprep.subr.mxu0 0.0
    %1654 = vmatpush1.msra.mxu0 0.0
    %1655 = vmatprep.subr.mxu0 0.0
    %1656 = vmatpush1.msra.mxu0 0.0
    %1657 = vmatprep.subr.mxu0 0.0
    %1658 = vmatpush1.msra.mxu0 0.0
    %1659 = vmatprep.subr.mxu0 0.0
    %1660 = vmatpush1.msra.mxu0 0.0
    %1661 = vmatprep.subr.mxu0 0.0
    %1662 = vmatpush1.msra.mxu0 0.0
    %1663 = vmatprep.subr.mxu0 0.0
    %1664 = vmatpush1.msra.mxu0 0.0
    %1665 = vmatprep.subr.mxu0 0.0
    %1666 = vmatpush1.msra.mxu0 0.0
    %1667 = vmatprep.subr.mxu0 0.0
    %1668 = vmatpush1.msra.mxu0 0.0
    %1669 = vmatprep.subr.mxu0 0.0
    %1670 = vmatpush1.msra.mxu0 0.0
    %1671 = vmatprep.subr.mxu0 0.0
    %1672 = vmatpush1.msra.mxu0 0.0
    %1673 = vmatprep.subr.mxu0 0.0
    %1674 = vmatpush1.msra.mxu0 0.0
    %1675 = vmatprep.subr.mxu0 0.0
    %1676 = vmatpush1.msra.mxu0 0.0
    %1677 = vmatprep.subr.mxu0 0.0
    %1678 = vmatpush1.msra.mxu0 0.0
    %1679 = vmatprep.subr.mxu0 0.0
    %1680 = vmatpush1.msra.mxu0 0.0
    %1681 = vmatprep.subr.mxu0 0.0
    %1682 = vmatpush1.msra.mxu0 0.0
    %1683 = vmatprep.subr.mxu0 0.0
    %1684 = vmatpush1.msra.mxu0 0.0
    %1685 = vmatprep.subr.mxu0 0.0
    %1686 = vmatpush1.msra.mxu0 0.0
    %1687 = vmatprep.subr.mxu0 0.0
    %1688 = vmatpush1.msra.mxu0 0.0
    %1689 = vmatprep.subr.mxu0 0.0
    %1690 = vmatpush1.msra.mxu0 0.0
    %1691 = vmatprep.mubr.f32.mxu0 0.0
    %1692 = vmatmul.mubr.f32.gmra.mrb[0].mxu0 %v361
    %v1693 = vpop.f32.mrb[0].mxu0
    %v1694 = vadd.f32 %v1552, %v1693
    %v1695 = vpop.f32.mrb[0].mxu0
    %v1696 = vadd.f32 %v1554, %v1695
    %1697 = vdwg.mxu0
    %s1698 = scalar_lea.vmem [#allocation14], 8
    %v1699 = vld [vmem:[%s1698] sm:$0xf]
    %v1701 = vlaneseq
    %v1702 = vshrl.u32 %v1701, 7
    %v1703 = vsub.s32 0, %v1702
    %v1704 = vrot.slane %v1699, %v1703
    %v1705 = vlaneseq
    %v1706 = vshrl.u32 %v1705, 7
    %v1707 = vsub.s32 1, %v1706
    %v1708 = vrot.slane %v1699, %v1707
    %v1709 = vlaneseq
    %v1710 = vshrl.u32 %v1709, 7
    %v1711 = vsub.s32 2, %v1710
    %v1712 = vrot.slane %v1699, %v1711
    %v1713 = vlaneseq
    %v1714 = vshrl.u32 %v1713, 7
    %v1715 = vsub.s32 3, %v1714
    %v1716 = vrot.slane %v1699, %v1715
    %v1721 = vadd.f32 %v1623, %v1704
    %v1722 = vadd.f32 %v1625, %v1708
    %v1723 = vadd.f32 %v1694, %v1712
    %v1724 = vadd.f32 %v1696, %v1716
    %s1725 = scalar_lea.vmem [#allocation13], 512
    %v1726 = vld [vmem:[%s1725] sm:$0xff]
    %v1727 = vld [vmem:[%s1725 + $0x8] sm:$0xff]
    %v1728 = vld [vmem:[%s1725 + $0x10] sm:$0xff]
    %v1729 = vld [vmem:[%s1725 + $0x18] sm:$0xff]
    %v1730 = vld [vmem:[%s1725 + $0x20] sm:$0xff]
    %v1731 = vld [vmem:[%s1725 + $0x28] sm:$0xff]
    %v1732 = vld [vmem:[%s1725 + $0x30] sm:$0xff]
    %v1733 = vld [vmem:[%s1725 + $0x38] sm:$0xff]
    %v1734 = vld [vmem:[%s1725 + $0x40] sm:$0xff]
    %v1735 = vld [vmem:[%s1725 + $0x48] sm:$0xff]
    %v1736 = vld [vmem:[%s1725 + $0x50] sm:$0xff]
    %v1737 = vld [vmem:[%s1725 + $0x58] sm:$0xff]
    %v1738 = vld [vmem:[%s1725 + $0x60] sm:$0xff]
    %v1739 = vld [vmem:[%s1725 + $0x68] sm:$0xff]
    %v1740 = vld [vmem:[%s1725 + $0x70] sm:$0xff]
    %v1741 = vld [vmem:[%s1725 + $0x78] sm:$0xff]
    %v1742 = vld [vmem:[%s1725 + $0x80] sm:$0xff]
    %v1743 = vld [vmem:[%s1725 + $0x88] sm:$0xff]
    %v1744 = vld [vmem:[%s1725 + $0x90] sm:$0xff]
    %v1745 = vld [vmem:[%s1725 + $0x98] sm:$0xff]
    %v1746 = vld [vmem:[%s1725 + $0xa0] sm:$0xff]
    %v1747 = vld [vmem:[%s1725 + $0xa8] sm:$0xff]
    %v1748 = vld [vmem:[%s1725 + $0xb0] sm:$0xff]
    %v1749 = vld [vmem:[%s1725 + $0xb8] sm:$0xff]
    %v1750 = vld [vmem:[%s1725 + $0xc0] sm:$0xff]
    %v1751 = vld [vmem:[%s1725 + $0xc8] sm:$0xff]
    %v1752 = vld [vmem:[%s1725 + $0xd0] sm:$0xff]
    %v1753 = vld [vmem:[%s1725 + $0xd8] sm:$0xff]
    %v1754 = vld [vmem:[%s1725 + $0xe0] sm:$0xff]
    %v1755 = vld [vmem:[%s1725 + $0xe8] sm:$0xff]
    %v1756 = vld [vmem:[%s1725 + $0xf0] sm:$0xff]
    %v1757 = vld [vmem:[%s1725 + $0xf8] sm:$0xff]
    %v1758 = vld [vmem:[%s1725 + $0x100] sm:$0xff]
    %v1759 = vld [vmem:[%s1725 + $0x108] sm:$0xff]
    %v1760 = vld [vmem:[%s1725 + $0x110] sm:$0xff]
    %v1761 = vld [vmem:[%s1725 + $0x118] sm:$0xff]
    %v1762 = vld [vmem:[%s1725 + $0x120] sm:$0xff]
    %v1763 = vld [vmem:[%s1725 + $0x128] sm:$0xff]
    %v1764 = vld [vmem:[%s1725 + $0x130] sm:$0xff]
    %v1765 = vld [vmem:[%s1725 + $0x138] sm:$0xff]
    %v1766 = vld [vmem:[%s1725 + $0x140] sm:$0xff]
    %v1767 = vld [vmem:[%s1725 + $0x148] sm:$0xff]
    %v1768 = vld [vmem:[%s1725 + $0x150] sm:$0xff]
    %v1769 = vld [vmem:[%s1725 + $0x158] sm:$0xff]
    %v1770 = vld [vmem:[%s1725 + $0x160] sm:$0xff]
    %v1771 = vld [vmem:[%s1725 + $0x168] sm:$0xff]
    %v1772 = vld [vmem:[%s1725 + $0x170] sm:$0xff]
    %v1773 = vld [vmem:[%s1725 + $0x178] sm:$0xff]
    %v1774 = vld [vmem:[%s1725 + $0x180] sm:$0xff]
    %v1775 = vld [vmem:[%s1725 + $0x188] sm:$0xff]
    %v1776 = vld [vmem:[%s1725 + $0x190] sm:$0xff]
    %v1777 = vld [vmem:[%s1725 + $0x198] sm:$0xff]
    %v1778 = vld [vmem:[%s1725 + $0x1a0] sm:$0xff]
    %v1779 = vld [vmem:[%s1725 + $0x1a8] sm:$0xff]
    %v1780 = vld [vmem:[%s1725 + $0x1b0] sm:$0xff]
    %v1781 = vld [vmem:[%s1725 + $0x1b8] sm:$0xff]
    %v1782 = vld [vmem:[%s1725 + $0x1c0] sm:$0xff]
    %v1783 = vld [vmem:[%s1725 + $0x1c8] sm:$0xff]
    %v1784 = vld [vmem:[%s1725 + $0x1d0] sm:$0xff]
    %v1785 = vld [vmem:[%s1725 + $0x1d8] sm:$0xff]
    %v1786 = vld [vmem:[%s1725 + $0x1e0] sm:$0xff]
    %v1787 = vld [vmem:[%s1725 + $0x1e8] sm:$0xff]
    %v1788 = vld [vmem:[%s1725 + $0x1f0] sm:$0xff]
    %v1789 = vld [vmem:[%s1725 + $0x1f8] sm:$0xff]
    %1790 = vmatprep.subr.mxu0 %v1727
    %1791 = vmatpush1.msra.mxu0 %v1726
    %1792 = vmatprep.subr.mxu0 %v1731
    %1793 = vmatpush1.msra.mxu0 %v1730
    %1794 = vmatprep.subr.mxu0 %v1735
    %1795 = vmatpush1.msra.mxu0 %v1734
    %1796 = vmatprep.subr.mxu0 %v1739
    %1797 = vmatpush1.msra.mxu0 %v1738
    %1798 = vmatprep.subr.mxu0 %v1743
    %1799 = vmatpush1.msra.mxu0 %v1742
    %1800 = vmatprep.subr.mxu0 %v1747
    %1801 = vmatpush1.msra.mxu0 %v1746
    %1802 = vmatprep.subr.mxu0 %v1751
    %1803 = vmatpush1.msra.mxu0 %v1750
    %1804 = vmatprep.subr.mxu0 %v1755
    %1805 = vmatpush1.msra.mxu0 %v1754
    %1806 = vmatprep.subr.mxu0 %v1759
    %1807 = vmatpush1.msra.mxu0 %v1758
    %1808 = vmatprep.subr.mxu0 %v1763
    %1809 = vmatpush1.msra.mxu0 %v1762
    %1810 = vmatprep.subr.mxu0 %v1767
    %1811 = vmatpush1.msra.mxu0 %v1766
    %1812 = vmatprep.subr.mxu0 %v1771
    %1813 = vmatpush1.msra.mxu0 %v1770
    %1814 = vmatprep.subr.mxu0 %v1775
    %1815 = vmatpush1.msra.mxu0 %v1774
    %1816 = vmatprep.subr.mxu0 %v1779
    %1817 = vmatpush1.msra.mxu0 %v1778
    %1818 = vmatprep.subr.mxu0 %v1783
    %1819 = vmatpush1.msra.mxu0 %v1782
    %1820 = vmatprep.subr.mxu0 %v1787
    %1821 = vmatpush1.msra.mxu0 %v1786
    %1822 = vmatprep.subr.mxu0 0.0
    %1823 = vmatpush1.msra.mxu0 0.0
    %1824 = vmatprep.subr.mxu0 0.0
    %1825 = vmatpush1.msra.mxu0 0.0
    %1826 = vmatprep.subr.mxu0 0.0
    %1827 = vmatpush1.msra.mxu0 0.0
    %1828 = vmatprep.subr.mxu0 0.0
    %1829 = vmatpush1.msra.mxu0 0.0
    %1830 = vmatprep.subr.mxu0 0.0
    %1831 = vmatpush1.msra.mxu0 0.0
    %1832 = vmatprep.subr.mxu0 0.0
    %1833 = vmatpush1.msra.mxu0 0.0
    %1834 = vmatprep.subr.mxu0 0.0
    %1835 = vmatpush1.msra.mxu0 0.0
    %1836 = vmatprep.subr.mxu0 0.0
    %1837 = vmatpush1.msra.mxu0 0.0
    %1838 = vmatprep.subr.mxu0 0.0
    %1839 = vmatpush1.msra.mxu0 0.0
    %1840 = vmatprep.subr.mxu0 0.0
    %1841 = vmatpush1.msra.mxu0 0.0
    %1842 = vmatprep.subr.mxu0 0.0
    %1843 = vmatpush1.msra.mxu0 0.0
    %1844 = vmatprep.subr.mxu0 0.0
    %1845 = vmatpush1.msra.mxu0 0.0
    %1846 = vmatprep.subr.mxu0 0.0
    %1847 = vmatpush1.msra.mxu0 0.0
    %1848 = vmatprep.subr.mxu0 0.0
    %1849 = vmatpush1.msra.mxu0 0.0
    %1850 = vmatprep.subr.mxu0 0.0
    %1851 = vmatpush1.msra.mxu0 0.0
    %1852 = vmatprep.subr.mxu0 0.0
    %1853 = vmatpush1.msra.mxu0 0.0
    %1854 = vmatprep.mubr.f32.mxu0 0.0
    %1855 = vmatmul.mubr.f32.gmra.mrb[0].mxu0 %v1332
    %v1856 = vpop.f32.mrb[0].mxu0
    %v1857 = vadd.f32 0.0, %v1856
    %v1858 = vpop.f32.mrb[0].mxu0
    %v1859 = vadd.f32 0.0, %v1858
    %1860 = vdwg.mxu0
    %1861 = vmatprep.subr.mxu0 %v1729
    %1862 = vmatpush1.msra.mxu0 %v1728
    %1863 = vmatprep.subr.mxu0 %v1733
    %1864 = vmatpush1.msra.mxu0 %v1732
    %1865 = vmatprep.subr.mxu0 %v1737
    %1866 = vmatpush1.msra.mxu0 %v1736
    %1867 = vmatprep.subr.mxu0 %v1741
    %1868 = vmatpush1.msra.mxu0 %v1740
    %1869 = vmatprep.subr.mxu0 %v1745
    %1870 = vmatpush1.msra.mxu0 %v1744
    %1871 = vmatprep.subr.mxu0 %v1749
    %1872 = vmatpush1.msra.mxu0 %v1748
    %1873 = vmatprep.subr.mxu0 %v1753
    %1874 = vmatpush1.msra.mxu0 %v1752
    %1875 = vmatprep.subr.mxu0 %v1757
    %1876 = vmatpush1.msra.mxu0 %v1756
    %1877 = vmatprep.subr.mxu0 %v1761
    %1878 = vmatpush1.msra.mxu0 %v1760
    %1879 = vmatprep.subr.mxu0 %v1765
    %1880 = vmatpush1.msra.mxu0 %v1764
    %1881 = vmatprep.subr.mxu0 %v1769
    %1882 = vmatpush1.msra.mxu0 %v1768
    %1883 = vmatprep.subr.mxu0 %v1773
    %1884 = vmatpush1.msra.mxu0 %v1772
    %1885 = vmatprep.subr.mxu0 %v1777
    %1886 = vmatpush1.msra.mxu0 %v1776
    %1887 = vmatprep.subr.mxu0 %v1781
    %1888 = vmatpush1.msra.mxu0 %v1780
    %1889 = vmatprep.subr.mxu0 %v1785
    %1890 = vmatpush1.msra.mxu0 %v1784
    %1891 = vmatprep.subr.mxu0 %v1789
    %1892 = vmatpush1.msra.mxu0 %v1788
    %1893 = vmatprep.subr.mxu0 0.0
    %1894 = vmatpush1.msra.mxu0 0.0
    %1895 = vmatprep.subr.mxu0 0.0
    %1896 = vmatpush1.msra.mxu0 0.0
    %1897 = vmatprep.subr.mxu0 0.0
    %1898 = vmatpush1.msra.mxu0 0.0
    %1899 = vmatprep.subr.mxu0 0.0
    %1900 = vmatpush1.msra.mxu0 0.0
    %1901 = vmatprep.subr.mxu0 0.0
    %1902 = vmatpush1.msra.mxu0 0.0
    %1903 = vmatprep.subr.mxu0 0.0
    %1904 = vmatpush1.msra.mxu0 0.0
    %1905 = vmatprep.subr.mxu0 0.0
    %1906 = vmatpush1.msra.mxu0 0.0
    %1907 = vmatprep.subr.mxu0 0.0
    %1908 = vmatpush1.msra.mxu0 0.0
    %1909 = vmatprep.subr.mxu0 0.0
    %1910 = vmatpush1.msra.mxu0 0.0
    %1911 = vmatprep.subr.mxu0 0.0
    %1912 = vmatpush1.msra.mxu0 0.0
    %1913 = vmatprep.subr.mxu0 0.0
    %1914 = vmatpush1.msra.mxu0 0.0
    %1915 = vmatprep.subr.mxu0 0.0
    %1916 = vmatpush1.msra.mxu0 0.0
    %1917 = vmatprep.subr.mxu0 0.0
    %1918 = vmatpush1.msra.mxu0 0.0
    %1919 = vmatprep.subr.mxu0 0.0
    %1920 = vmatpush1.msra.mxu0 0.0
    %1921 = vmatprep.subr.mxu0 0.0
    %1922 = vmatpush1.msra.mxu0 0.0
    %1923 = vmatprep.subr.mxu0 0.0
    %1924 = vmatpush1.msra.mxu0 0.0
    %1925 = vmatprep.mubr.f32.mxu0 0.0
    %1926 = vmatmul.mubr.f32.gmra.mrb[0].mxu0 %v1332
    %v1927 = vpop.f32.mrb[0].mxu0
    %v1928 = vadd.f32 0.0, %v1927
    %v1929 = vpop.f32.mrb[0].mxu0
    %v1930 = vadd.f32 0.0, %v1929
    %1931 = vdwg.mxu0
    %v1932 = vadd.f32 %v1721, %v1857
    %v1933 = vadd.f32 %v1722, %v1859
    %v1934 = vadd.f32 %v1723, %v1928
    %v1935 = vadd.f32 %v1724, %v1930
    %s1936 = scalar_lea.vmem %s8, 16
    %v1937 = vld [vmem:[%s1936] sm:$0xff]
    %1938 = vmatprep.subr.mxu0 0.0
    %1939 = vmatpush1.msra.mxu0 %v1937
    %1940 = vmatprep.subr.mxu0 0.0
    %1941 = vmatpush1.msra.mxu0 0.0
    %1942 = vmatprep.subr.mxu0 0.0
    %1943 = vmatpush1.msra.mxu0 0.0
    %1944 = vmatprep.subr.mxu0 0.0
    %1945 = vmatpush1.msra.mxu0 0.0
    %1946 = vmatprep.subr.mxu0 0.0
    %1947 = vmatpush1.msra.mxu0 0.0
    %1948 = vmatprep.subr.mxu0 0.0
    %1949 = vmatpush1.msra.mxu0 0.0
    %1950 = vmatprep.subr.mxu0 0.0
    %1951 = vmatpush1.msra.mxu0 0.0
    %1952 = vmatprep.subr.mxu0 0.0
    %1953 = vmatpush1.msra.mxu0 0.0
    %1954 = vmatprep.subr.mxu0 0.0
    %1955 = vmatpush1.msra.mxu0 0.0
    %1956 = vmatprep.subr.mxu0 0.0
    %1957 = vmatpush1.msra.mxu0 0.0
    %1958 = vmatprep.subr.mxu0 0.0
    %1959 = vmatpush1.msra.mxu0 0.0
    %1960 = vmatprep.subr.mxu0 0.0
    %1961 = vmatpush1.msra.mxu0 0.0
    %1962 = vmatprep.subr.mxu0 0.0
    %1963 = vmatpush1.msra.mxu0 0.0
    %1964 = vmatprep.subr.mxu0 0.0
    %1965 = vmatpush1.msra.mxu0 0.0
    %1966 = vmatprep.subr.mxu0 0.0
    %1967 = vmatpush1.msra.mxu0 0.0
    %1968 = vmatprep.subr.mxu0 0.0
    %1969 = vmatpush1.msra.mxu0 0.0
    %1970 = vmatprep.subr.mxu0 0.0
    %1971 = vmatpush1.msra.mxu0 0.0
    %1972 = vmatprep.subr.mxu0 0.0
    %1973 = vmatpush1.msra.mxu0 0.0
    %1974 = vmatprep.subr.mxu0 0.0
    %1975 = vmatpush1.msra.mxu0 0.0
    %1976 = vmatprep.subr.mxu0 0.0
    %1977 = vmatpush1.msra.mxu0 0.0
    %1978 = vmatprep.subr.mxu0 0.0
    %1979 = vmatpush1.msra.mxu0 0.0
    %1980 = vmatprep.subr.mxu0 0.0
    %1981 = vmatpush1.msra.mxu0 0.0
    %1982 = vmatprep.subr.mxu0 0.0
    %1983 = vmatpush1.msra.mxu0 0.0
    %1984 = vmatprep.subr.mxu0 0.0
    %1985 = vmatpush1.msra.mxu0 0.0
    %1986 = vmatprep.subr.mxu0 0.0
    %1987 = vmatpush1.msra.mxu0 0.0
    %1988 = vmatprep.subr.mxu0 0.0
    %1989 = vmatpush1.msra.mxu0 0.0
    %1990 = vmatprep.subr.mxu0 0.0
    %1991 = vmatpush1.msra.mxu0 0.0
    %1992 = vmatprep.subr.mxu0 0.0
    %1993 = vmatpush1.msra.mxu0 0.0
    %1994 = vmatprep.subr.mxu0 0.0
    %1995 = vmatpush1.msra.mxu0 0.0
    %1996 = vmatprep.subr.mxu0 0.0
    %1997 = vmatpush1.msra.mxu0 0.0
    %1998 = vmatprep.subr.mxu0 0.0
    %1999 = vmatpush1.msra.mxu0 0.0
    %2000 = vmatprep.subr.mxu0 0.0
    %2001 = vmatpush1.msra.mxu0 0.0
    %2002 = vmatprep.mubr.f32.mxu0 0.0
    %2003 = vmatmul.mubr.f32.gmra.mrb[0].mxu0 %v534
    %v2004 = vpop.f32.mrb[0].mxu0
    %v2005 = vadd.f32 0.0, %v2004
    %v2006 = vpop.f32.mrb[0].mxu0
    %2007 = vdwg.mxu0
    %v2008 = vtanh.pop %v2005
    %s2009 = scalar_lea.vmem [#allocation8], 16
    %v2010 = vld [vmem:[%s2009] sm:$0xff]
    %v2011 = vxor.u32 %v1932, 2147483648
    %v2012 = vmul.f32 %v2011, 1.442695
    %v2013 = vpow.pop %v2012
    %v2014 = vadd.f32 %v2013, 1.0
    %v2015 = vrcp.pop %v2014
    %v2016 = vmul.f32 1.0, %v2015
    %v2017 = vxor.u32 %v1933, 2147483648
    %v2018 = vmul.f32 %v2017, 1.442695
    %v2019 = vpow.pop %v2018
    %v2020 = vadd.f32 %v2019, 1.0
    %v2021 = vrcp.pop %v2020
    %v2022 = vmul.f32 1.0, %v2021
    %v2023 = vtanh.pop %v1934
    %v2024 = vxor.u32 %v1935, 2147483648
    %v2025 = vmul.f32 %v2024, 1.442695
    %v2026 = vpow.pop %v2025
    %v2027 = vadd.f32 %v2026, 1.0
    %v2028 = vrcp.pop %v2027
    %v2029 = vmul.f32 1.0, %v2028
    %v2030 = vmul.f32 %v2022, %v2010
    %v2031 = vmul.f32 %v2016, %v2023
    %v2032 = vadd.f32 %v2030, %v2031
    %v2033 = vadd.f32 %v2032, %v2008
    %v2034 = vtanh.pop %v2033
    %v2035 = vmul.f32 %v2029, %v2034
    %s2036 = scalar_lea.vmem [#allocation16], 16
    %2037 = vst [vmem:[%s2036] sm:$0xff] %v2035
    %s2038 = scalar_lea.vmem [#allocation17], 16
    %2039 = vst [vmem:[%s2038] sm:$0xff] %v2033
    %2040 = vst [vmem:[#allocation19 + $0x10] sm:$0xff] %v2035
    // Predicated region
    $region70: #{tpu_custom_call.1} parent=1 // pred_check
      _
    $region71: #{tpu_custom_call.1} parent=1 // pred_check_branch
      %2042 = sbr.rel (0) target = $region73
    $region72: #{tpu_custom_call.1} parent=1 // pred_region
      %s2044 = ssub.s32 384, 384
      %2045 = vsyncadd [#allocation4], %s2044
      %s2046 = sshll.u32 [#allocation16], 4
      %s2047 = int_to_ptr.vmem [resolvable:$true] %s2046
      %2052 = dma.vmem_to_hbm [thread:$0]  %s2047, 384, %s9, [#allocation4], 128, 128, 8
    $region73: #{tpu_custom_call.1} parent=1 // pred_fallthru
      _
    // Predicated region
    $region74: #{tpu_custom_call.1} parent=1 // pred_check
      _
    $region75: #{tpu_custom_call.1} parent=1 // pred_check_branch
      %2054 = sbr.rel (0) target = $region77
    $region76: #{tpu_custom_call.1} parent=1 // pred_region
      %s2056 = ssub.s32 384, 384
      %2057 = vsyncadd [#allocation18], %s2056
      %s2058 = sshll.u32 [#allocation17], 4
      %s2059 = int_to_ptr.vmem [resolvable:$true] %s2058
      %2064 = dma.vmem_to_hbm [thread:$0]  %s2059, 384, %s10, [#allocation18], 128, 128, 8
    $region77: #{tpu_custom_call.1} parent=1 // pred_fallthru
      _
    // Predicated region
    $region78: #{tpu_custom_call.1} parent=1 // pred_check
      _
    $region79: #{tpu_custom_call.1} parent=1 // pred_check_branch
      %2066 = sbr.rel (0) target = $region81
    $region80: #{tpu_custom_call.1} parent=1 // pred_region
      %s2068 = ssub.s32 384, 384
      %2069 = vsyncadd [#allocation18], %s2068
      %s2071 = sshll.u32 [#allocation19], 4
      %s2072 = int_to_ptr.vmem [resolvable:$true] %s2071
      %2074 = dma.vmem_to_hbm [thread:$0]  %s2072, 384, %s11, [#allocation18]
    $region81: #{tpu_custom_call.1} parent=1 // pred_fallthru
      _
    // Predicated region
    $region82: #{tpu_custom_call.1} parent=1 // pred_check
      _
    $region83: #{tpu_custom_call.1} parent=1 // pred_check_branch
      %2076 = sbr.rel (0) target = $region85
    $region84: #{tpu_custom_call.1} parent=1 // pred_region
      %2077 = dma.done [#allocation4], 384
    $region85: #{tpu_custom_call.1} parent=1 // pred_fallthru
      _
    // Predicated region
    $region86: #{tpu_custom_call.1} parent=1 // pred_check
      _
    $region87: #{tpu_custom_call.1} parent=1 // pred_check_branch
      %2079 = sbr.rel (0) target = $region89
    $region88: #{tpu_custom_call.1} parent=1 // pred_region
      %2080 = dma.done [#allocation18], 384
    $region89: #{tpu_custom_call.1} parent=1 // pred_fallthru
      _
    // Predicated region
    $region90: #{tpu_custom_call.1} parent=1 // pred_check
      _
    $region91: #{tpu_custom_call.1} parent=1 // pred_check_branch
      %2082 = sbr.rel (0) target = $region93
    $region92: #{tpu_custom_call.1} parent=1 // pred_region
      %2083 = dma.done [#allocation18], 384
    $region93: #{tpu_custom_call.1} parent=1 // pred_fallthru
      _
    %2084 = vsyncpa [#allocation3], 1
    %2085 = vsyncpa [#allocation6], 1
    %2086 = vsyncpa [#allocation9], 1
    %2087 = vsyncpa [#allocation12], 1
    %2088 = vsyncpa [#allocation15], 1
    %2089 = vsyncpa [#allocation4], 1
    %2090 = vsyncpa [#allocation18], 1

</llo_original>
